<compile_context>
chip_gen: v6e
topology: v6e:2x2x1
jax: 0.10.0
libtpu: 0.0.40
codegen_flags: <defaults>
</compile_context>

<pallas_src>
import functools

import jax
import jax.numpy as jnp
import numpy as np
from jax.experimental import pallas as pl
from jax.experimental.pallas import tpu as pltpu

_MATMUL_DTYPE = jnp.float32   # jnp.bfloat16 on v6e/v7x (relax the test tolerance)


# ----------------------------------------------------------------------------
# Pallas kernel: serial GRU recurrence, all dups block-diag-packed on lanes.
# ----------------------------------------------------------------------------
def _gru_bd_kernel(gi_ref, w_ref, bn_ref, o_ref, h_ref, *, ts, matmul_dtype):
    """Grid = (batch_tiles, time_tiles)   [time last, 'arbitrary'].

      gi_ref : (3, TS, TB, DH)  gate-major input projections (r, z, n);
                                 biases for r/z (b_ih+b_hh) and b_ih for n already folded in.
      w_ref  : (3, DH, DH)      block-diagonal recurrent weights per gate (r, z, n).
      bn_ref : (1, DH)          b_hh for the n gate (must stay with h @ W_n).
      o_ref  : (TS, TB, DH)     hidden state for every timestep of this tile.
      h_ref  : (TB, DH)         VMEM scratch carrying the state across time tiles.
    """
    # Zero the hidden state only at the first time tile of each batch tile.
    @pl.when(pl.program_id(1) == 0)
    def _():
        h_ref[...] = jnp.zeros_like(h_ref)

    # Gate split is a free leading-axis index (no lane slicing in the time loop).
    w_r = w_ref[0].astype(matmul_dtype)
    w_z = w_ref[1].astype(matmul_dtype)
    w_n = w_ref[2].astype(matmul_dtype)
    # Hoist the bias broadcast out of the serial loop.
    b_n = jnp.broadcast_to(bn_ref[...], h_ref.shape)

    def step(t, carry):
        h = h_ref[...]                                           # (TB, DH) f32
        h_mm = h.astype(matmul_dtype)
        h_r = jnp.dot(h_mm, w_r, preferred_element_type=jnp.float32)
        h_z = jnp.dot(h_mm, w_z, preferred_element_type=jnp.float32)
        h_n = jnp.dot(h_mm, w_n, preferred_element_type=jnp.float32) + b_n
        r = jax.nn.sigmoid(gi_ref[0, t] + h_r)
        z = jax.nn.sigmoid(gi_ref[1, t] + h_z)
        n = jnp.tanh(gi_ref[2, t] + r * h_n)
        h_new = (1.0 - z) * n + z * h
        h_ref[...] = h_new
        o_ref[t] = h_new.astype(o_ref.dtype)
        return carry

    jax.lax.fori_loop(0, ts, step, 0, unroll=(ts <= 16))


# ----------------------------------------------------------------------------
# Tile selection + pallas_call wrapper
# ----------------------------------------------------------------------------
def _pick_batch_tile(batch):
    # A second ("parallel") grid axis so v7x's two TensorCores both get work.
    for tb in (128, 64, 32, 16, 8):
        if batch % tb == 0 and batch // tb >= 2:
            return tb
    return batch            # single full-extent tile (always BlockSpec-legal)


def _pick_time_tile(seq, tb, dh, budget_bytes=20 << 20):
    # Double-buffered (3 gate inputs + 1 output) f32 stream per timestep.
    per_step = 2 * 4 * tb * dh * 4
    cap = max(1, budget_bytes // per_step)
    if seq <= cap:
        return seq
    for ts in range(int(cap), 0, -1):        # prefer a divisor of S (no padding)
        if seq % ts == 0 and ts >= max(1, cap // 2):
            return ts
    return int(cap)                           # fall back to padding the sequence


def gru_recurrence(gi, w_bd, bhh_n):
    """gi: (3, S, B, DH) gate-major; w_bd: (3, DH, DH); bhh_n: (1, DH) -> (S, B, DH)."""
    _, S, B, DH = gi.shape
    TB = _pick_batch_tile(B)
    TS = _pick_time_tile(S, TB, DH)
    S_pad = ((S + TS - 1) // TS) * TS
    if S_pad != S:
        # Forward recurrence is causal: zero-padding at the END never affects
        # the first S outputs, which are all we keep.
        gi = jnp.pad(gi, ((0, 0), (0, S_pad - S), (0, 0), (0, 0)))

    # VMEM budget: double-buffered streaming blocks + resident weights + scratch.
    block_bytes = 2 * 4 * TS * TB * DH * 4
    block_bytes += 2 * (3 * DH * DH + DH) * 4
    block_bytes += TB * DH * 4
    vmem_limit = int(min(48 << 20, max(32 << 20, block_bytes * 1.5)))

    out = pl.pallas_call(
        functools.partial(_gru_bd_kernel, ts=TS, matmul_dtype=_MATMUL_DTYPE),
        out_shape=jax.ShapeDtypeStruct((S_pad, B, DH), jnp.float32),
        grid_spec=pltpu.PrefetchScalarGridSpec(
            num_scalar_prefetch=0,
            grid=(B // TB, S_pad // TS),
            in_specs=[
                pl.BlockSpec((3, TS, TB, DH), lambda b, t: (0, t, b, 0)),
                # Weights/bias ignore both grid axes -> stay resident in VMEM.
                pl.BlockSpec((3, DH, DH), lambda b, t: (0, 0, 0)),
                pl.BlockSpec((1, DH), lambda b, t: (0, 0)),
            ],
            out_specs=pl.BlockSpec((TS, TB, DH), lambda b, t: (t, b, 0)),
            scratch_shapes=[pltpu.VMEM((TB, DH), jnp.float32)],
        ),
        compiler_params=pltpu.CompilerParams(
            dimension_semantics=("parallel", "arbitrary"),
            vmem_limit_bytes=vmem_limit,
        ),
    )(gi, w_bd, bhh_n)
    return out[:S]


# ----------------------------------------------------------------------------
# Per-layer parameter prep: gate-major input weights, block-diag recurrent
# weights, folded biases.
# ----------------------------------------------------------------------------
def _prep_layer_params(wih, whh, bih, bhh, hidden):
    D, Din, _ = wih.shape
    H = hidden
    wih_g = wih.reshape(D, Din, 3, H)                              # (D, in, 3, H)
    whh_g = jnp.transpose(whh.reshape(D, H, 3, H), (2, 0, 1, 3))   # (3, D, H, H)
    eye = jnp.eye(D, dtype=whh.dtype)
    # Block-diagonal: w_bd[g, d*H+i, e*H+j] = (d==e) * whh[e][i, gate g, j]
    w_bd = jnp.einsum('de,gdij->gdiej', eye, whh_g).reshape(3, D * H, D * H)

    bih_g = jnp.transpose(bih.reshape(D, 3, H), (1, 0, 2))         # (3, D, H)
    bhh_g = jnp.transpose(bhh.reshape(D, 3, H), (1, 0, 2))         # (3, D, H)
    # Fold b_hh into gi for the r/z gates; the n-gate b_hh stays with h @ W_n.
    gi_bias = jnp.stack(
        [bih_g[0] + bhh_g[0], bih_g[1] + bhh_g[1], bih_g[2]], axis=0)  # (3, D, H)
    bhh_n = bhh_g[2].reshape(1, D * H)                             # (1, D*H)
    return wih_g, w_bd, gi_bias, bhh_n


@jax.jit
def krnn_encoder_forward(x, params):
    """KRNNEncoderBase.forward.  x: (batch, seq, input_dim) -> (batch, seq, H)."""
    B, S, _ = x.shape
    D = params[0][0].shape[0]
    H = params[0][1].shape[1]
    xt = jnp.transpose(x, (1, 0, 2))                               # (S, B, Din)

    cur = xt                                                       # layer-0 input, shared across dups
    for (wih, whh, bih, bhh) in params:
        wih_g, w_bd, gi_bias, bhh_n = _prep_layer_params(wih, whh, bih, bhh, H)
        # Hoisted input projection: one batched matmul over all dups & timesteps,
        # emitted gate-major so the kernel never lane-slices gates.
        if cur.ndim == 3:
            gi = jnp.einsum('sbi,digh->gsbdh', cur, wih_g)         # dup broadcast inside einsum
        else:
            gi = jnp.einsum('sbdi,digh->gsbdh', cur, wih_g)
        gi = (gi + gi_bias[:, None, None]).reshape(3, S, B, D * H)
        out = gru_recurrence(gi, w_bd, bhh_n)                      # (S, B, D*H)
        cur = out.reshape(S, B, D, H)

    hids = jnp.mean(cur, axis=2)                                   # mean over dups (S, B, H)
    return jnp.transpose(hids, (1, 0, 2))                          # (B, S, H)


# ----------------------------------------------------------------------------
# Deterministic parameter init (mimics PyTorch GRU uniform(-1/sqrt(H), 1/sqrt(H)))
# ----------------------------------------------------------------------------
def init_params(key, input_dim, hidden, dup_num, rnn_layers):
    params = []
    bound = 1.0 / float(np.sqrt(hidden))
    for layer in range(rnn_layers):
        in_l = input_dim if layer == 0 else hidden
        key, k1, k2, k3, k4 = jax.random.split(key, 5)
        wih = jax.random.uniform(k1, (dup_num, in_l, 3 * hidden), jnp.float32,
                                 -bound, bound)
        whh = jax.random.uniform(k2, (dup_num, hidden, 3 * hidden), jnp.float32,
                                 -bound, bound)
        bih = jax.random.uniform(k3, (dup_num, 1, 3 * hidden), jnp.float32,
                                 -bound, bound)
        bhh = jax.random.uniform(k4, (dup_num, 1, 3 * hidden), jnp.float32,
                                 -bound, bound)
        params.append((wih, whh, bih, bhh))
    return params


# ----------------------------------------------------------------------------
# Pure-JAX reference (for correctness check)
# ----------------------------------------------------------------------------
def _gru_layer_ref(x_sbd, wih, whh, bih, bhh):
    H = whh.shape[0]

    def step(h, xt):
        gi = xt @ wih + bih[0]
        gh = h @ whh + bhh[0]
        r = jax.nn.sigmoid(gi[:, :H] + gh[:, :H])
        z = jax.nn.sigmoid(gi[:, H:2 * H] + gh[:, H:2 * H])
        n = jnp.tanh(gi[:, 2 * H:] + r * gh[:, 2 * H:])
        h_new = (1.0 - z) * n + z * h
        return h_new, h_new

    h0 = jnp.zeros((x_sbd.shape[1], H), jnp.float32)
    _, hs = jax.lax.scan(step, h0, x_sbd)
    return hs


def krnn_encoder_ref(x, params):
    xt = jnp.transpose(x, (1, 0, 2))
    dup = params[0][0].shape[0]
    outs = []
    for d in range(dup):
        cur = xt
        for (wih, whh, bih, bhh) in params:
            cur = _gru_layer_ref(cur, wih[d], whh[d], bih[d], bhh[d])
        outs.append(cur)
    hids = jnp.mean(jnp.stack(outs, axis=-1), axis=-1)
    return jnp.transpose(hids, (1, 0, 2))


# ----------------------------------------------------------------------------
if __name__ == "__main__":
    batch, seq_len, input_dim = 2, 8, 4
    output_dim = 32           # GRU hidden size
    dup_num = 3
    rnn_layers = 2

    key = jax.random.PRNGKey(0)
    key, xkey, pkey = jax.random.split(key, 3)
    x = jax.random.normal(xkey, (batch, seq_len, input_dim), jnp.float32)
    params = init_params(pkey, input_dim, output_dim, dup_num, rnn_layers)

    out = krnn_encoder_forward(x, params)
    out = jax.block_until_ready(out)

    assert out.shape == (batch, seq_len, output_dim), out.shape

    ref = jax.block_until_ready(krnn_encoder_ref(x, params))
    np.testing.assert_allclose(np.asarray(out), np.asarray(ref),
                               rtol=1e-5, atol=1e-5)

    print("KERNEL_OK")
</pallas_src>

<mosaic_0001>
module attributes {stable_mosaic.version = 11 : i64} {
  func.func @_gru_bd_kernel(%arg0: i32, %arg1: i32, %arg2: memref<3x8x2x96xf32, #tpu.memory_space<vmem>>, %arg3: memref<3x96x96xf32, #tpu.memory_space<vmem>>, %arg4: memref<1x96xf32, #tpu.memory_space<vmem>>, %arg5: memref<8x2x96xf32, #tpu.memory_space<vmem>>, %arg6: memref<2x96xf32, #tpu.memory_space<vmem>>) attributes {dimension_semantics = [#tpu.dimension_semantics<parallel>, #tpu.dimension_semantics<arbitrary>], iteration_bounds = array<i64: 1, 1>, scalar_prefetch = 0 : i64, scratch_operands = 1 : i64, tpu.core_type = #tpu.core_type<tc>, window_params = [{transform_indices = @transform_0, window_bounds = array<i64: 3, 8, 2, 96>}, {pipeline_mode = #tpu.pipeline_mode<synchronous>, transform_indices = @transform_1, window_bounds = array<i64: 3, 96, 96>}, {pipeline_mode = #tpu.pipeline_mode<synchronous>, transform_indices = @transform_2, window_bounds = array<i64: 1, 96>}, {transform_indices = @transform_3, window_bounds = array<i64: 8, 2, 96>}]} {
    %c0_i32 = arith.constant 0 : i32
    %0 = arith.cmpi eq, %arg1, %c0_i32 : i32
    %1 = arith.extui %0 : i1 to i32
    %c0_i32_0 = arith.constant 0 : i32
    %2 = arith.cmpi ne, %1, %c0_i32_0 : i32
    scf.if %2 {
      %cst_177 = arith.constant 0.000000e+00 : f32
      %324 = vector.broadcast %cst_177 : f32 to vector<2x96xf32>
      %c0_178 = arith.constant 0 : index
      %c0_179 = arith.constant 0 : index
      %325 = vector.load %arg6[%c0_178, %c0_179] : memref<2x96xf32, #tpu.memory_space<vmem>>, vector<2x96xf32>
      tpu.vector_store %arg6[%c0_178, %c0_179], %324 {strides = array<i32>} : memref<2x96xf32, #tpu.memory_space<vmem>>, vector<2x96xf32>,
    } else {
    }
    %c0 = arith.constant 0 : index
    %c0_1 = arith.constant 0 : index
    %c0_2 = arith.constant 0 : index
    %3 = vector.load %arg3[%c0, %c0_1, %c0_2] : memref<3x96x96xf32, #tpu.memory_space<vmem>>, vector<1x96x96xf32>
    %4 = vector.shape_cast %3 : vector<1x96x96xf32> to vector<96x96xf32>
    %c1 = arith.constant 1 : index
    %c0_3 = arith.constant 0 : index
    %c0_4 = arith.constant 0 : index
    %5 = vector.load %arg3[%c1, %c0_3, %c0_4] : memref<3x96x96xf32, #tpu.memory_space<vmem>>, vector<1x96x96xf32>
    %6 = vector.shape_cast %5 : vector<1x96x96xf32> to vector<96x96xf32>
    %c2 = arith.constant 2 : index
    %c0_5 = arith.constant 0 : index
    %c0_6 = arith.constant 0 : index
    %7 = vector.load %arg3[%c2, %c0_5, %c0_6] : memref<3x96x96xf32, #tpu.memory_space<vmem>>, vector<1x96x96xf32>
    %8 = vector.shape_cast %7 : vector<1x96x96xf32> to vector<96x96xf32>
    %c0_7 = arith.constant 0 : index
    %c0_8 = arith.constant 0 : index
    %9 = vector.load %arg4[%c0_7, %c0_8] : memref<1x96xf32, #tpu.memory_space<vmem>>, vector<1x96xf32>
    %10 = vector.shape_cast %9 : vector<1x96xf32> to vector<1x96xf32>
    %11 = vector.broadcast %10 : vector<1x96xf32> to vector<2x96xf32>
    %c0_i32_9 = arith.constant 0 : i32
    %c0_10 = arith.constant 0 : index
    %c0_11 = arith.constant 0 : index
    %12 = vector.load %arg6[%c0_10, %c0_11] : memref<2x96xf32, #tpu.memory_space<vmem>>, vector<2x96xf32>
    %cst = arith.constant dense<0.000000e+00> : vector<2x96xf32>
    %13 = tpu.matmul %12, %4, %cst {dimension_numbers = #tpu.dot_dimension_numbers<[1], [0], [0], [1], [0, 0, 1, 1], [], []>} : vector<2x96xf32>, vector<96x96xf32>, vector<2x96xf32> -> vector<2x96xf32>
    %cst_12 = arith.constant dense<0.000000e+00> : vector<2x96xf32>
    %14 = tpu.matmul %12, %6, %cst_12 {dimension_numbers = #tpu.dot_dimension_numbers<[1], [0], [0], [1], [0, 0, 1, 1], [], []>} : vector<2x96xf32>, vector<96x96xf32>, vector<2x96xf32> -> vector<2x96xf32>
    %cst_13 = arith.constant dense<0.000000e+00> : vector<2x96xf32>
    %15 = tpu.matmul %12, %8, %cst_13 {dimension_numbers = #tpu.dot_dimension_numbers<[1], [0], [0], [1], [0, 0, 1, 1], [], []>} : vector<2x96xf32>, vector<96x96xf32>, vector<2x96xf32> -> vector<2x96xf32>
    %16 = arith.addf %15, %11 : vector<2x96xf32>
    %c0_14 = arith.constant 0 : index
    %17 = arith.index_cast %c0_i32_9 : i32 to index
    %c0_15 = arith.constant 0 : index
    %c0_16 = arith.constant 0 : index
    %18 = vector.load %arg2[%c0_14, %17, %c0_15, %c0_16] : memref<3x8x2x96xf32, #tpu.memory_space<vmem>>, vector<1x1x2x96xf32>
    %19 = vector.shape_cast %18 : vector<1x1x2x96xf32> to vector<2x96xf32>
    %20 = arith.addf %19, %13 : vector<2x96xf32>
    %21 = arith.negf %20 : vector<2x96xf32>
    %22 = math.exp %21 : vector<2x96xf32>
    %cst_17 = arith.constant 1.000000e+00 : f32
    %23 = vector.broadcast %cst_17 : f32 to vector<2x96xf32>
    %24 = arith.addf %23, %22 : vector<2x96xf32>
    %25 = arith.divf %23, %24 : vector<2x96xf32>
    %c1_18 = arith.constant 1 : index
    %26 = arith.index_cast %c0_i32_9 : i32 to index
    %c0_19 = arith.constant 0 : index
    %c0_20 = arith.constant 0 : index
    %27 = vector.load %arg2[%c1_18, %26, %c0_19, %c0_20] : memref<3x8x2x96xf32, #tpu.memory_space<vmem>>, vector<1x1x2x96xf32>
    %28 = vector.shape_cast %27 : vector<1x1x2x96xf32> to vector<2x96xf32>
    %29 = arith.addf %28, %14 : vector<2x96xf32>
    %30 = arith.negf %29 : vector<2x96xf32>
    %31 = math.exp %30 : vector<2x96xf32>
    %cst_21 = arith.constant 1.000000e+00 : f32
    %32 = vector.broadcast %cst_21 : f32 to vector<2x96xf32>
    %33 = arith.addf %32, %31 : vector<2x96xf32>
    %34 = arith.divf %32, %33 : vector<2x96xf32>
    %c2_22 = arith.constant 2 : index
    %35 = arith.index_cast %c0_i32_9 : i32 to index
    %c0_23 = arith.constant 0 : index
    %c0_24 = arith.constant 0 : index
    %36 = vector.load %arg2[%c2_22, %35, %c0_23, %c0_24] : memref<3x8x2x96xf32, #tpu.memory_space<vmem>>, vector<1x1x2x96xf32>
    %37 = vector.shape_cast %36 : vector<1x1x2x96xf32> to vector<2x96xf32>
    %38 = arith.mulf %25, %16 : vector<2x96xf32>
    %39 = arith.addf %37, %38 : vector<2x96xf32>
    %40 = math.tanh %39 : vector<2x96xf32>
    %cst_25 = arith.constant 1.000000e+00 : f32
    %41 = vector.broadcast %cst_25 : f32 to vector<2x96xf32>
    %42 = arith.subf %41, %34 : vector<2x96xf32>
    %43 = arith.mulf %42, %40 : vector<2x96xf32>
    %44 = arith.mulf %34, %12 : vector<2x96xf32>
    %45 = arith.addf %43, %44 : vector<2x96xf32>
    %c0_26 = arith.constant 0 : index
    %c0_27 = arith.constant 0 : index
    %46 = vector.load %arg6[%c0_26, %c0_27] : memref<2x96xf32, #tpu.memory_space<vmem>>, vector<2x96xf32>
    tpu.vector_store %arg6[%c0_26, %c0_27], %45 {strides = array<i32>} : memref<2x96xf32, #tpu.memory_space<vmem>>, vector<2x96xf32>,
    %47 = arith.index_cast %c0_i32_9 : i32 to index
    %c0_28 = arith.constant 0 : index
    %c0_29 = arith.constant 0 : index
    %48 = vector.load %arg5[%47, %c0_28, %c0_29] : memref<8x2x96xf32, #tpu.memory_space<vmem>>, vector<1x2x96xf32>
    %49 = vector.shape_cast %48 : vector<1x2x96xf32> to vector<2x96xf32>
    %50 = vector.shape_cast %45 : vector<2x96xf32> to vector<1x2x96xf32>
    tpu.vector_store %arg5[%47, %c0_28, %c0_29], %50 {strides = array<i32>} : memref<8x2x96xf32, #tpu.memory_space<vmem>>, vector<1x2x96xf32>,
    %c1_i32 = arith.constant 1 : i32
    %c0_30 = arith.constant 0 : index
    %c0_31 = arith.constant 0 : index
    %51 = vector.load %arg6[%c0_30, %c0_31] : memref<2x96xf32, #tpu.memory_space<vmem>>, vector<2x96xf32>
    %cst_32 = arith.constant dense<0.000000e+00> : vector<2x96xf32>
    %52 = tpu.matmul %51, %4, %cst_32 {dimension_numbers = #tpu.dot_dimension_numbers<[1], [0], [0], [1], [0, 0, 1, 1], [], []>} : vector<2x96xf32>, vector<96x96xf32>, vector<2x96xf32> -> vector<2x96xf32>
    %cst_33 = arith.constant dense<0.000000e+00> : vector<2x96xf32>
    %53 = tpu.matmul %51, %6, %cst_33 {dimension_numbers = #tpu.dot_dimension_numbers<[1], [0], [0], [1], [0, 0, 1, 1], [], []>} : vector<2x96xf32>, vector<96x96xf32>, vector<2x96xf32> -> vector<2x96xf32>
    %cst_34 = arith.constant dense<0.000000e+00> : vector<2x96xf32>
    %54 = tpu.matmul %51, %8, %cst_34 {dimension_numbers = #tpu.dot_dimension_numbers<[1], [0], [0], [1], [0, 0, 1, 1], [], []>} : vector<2x96xf32>, vector<96x96xf32>, vector<2x96xf32> -> vector<2x96xf32>
    %55 = arith.addf %54, %11 : vector<2x96xf32>
    %c0_35 = arith.constant 0 : index
    %56 = arith.index_cast %c1_i32 : i32 to index
    %c0_36 = arith.constant 0 : index
    %c0_37 = arith.constant 0 : index
    %57 = vector.load %arg2[%c0_35, %56, %c0_36, %c0_37] : memref<3x8x2x96xf32, #tpu.memory_space<vmem>>, vector<1x1x2x96xf32>
    %58 = vector.shape_cast %57 : vector<1x1x2x96xf32> to vector<2x96xf32>
    %59 = arith.addf %58, %52 : vector<2x96xf32>
    %60 = arith.negf %59 : vector<2x96xf32>
    %61 = math.exp %60 : vector<2x96xf32>
    %cst_38 = arith.constant 1.000000e+00 : f32
    %62 = vector.broadcast %cst_38 : f32 to vector<2x96xf32>
    %63 = arith.addf %62, %61 : vector<2x96xf32>
    %64 = arith.divf %62, %63 : vector<2x96xf32>
    %c1_39 = arith.constant 1 : index
    %65 = arith.index_cast %c1_i32 : i32 to index
    %c0_40 = arith.constant 0 : index
    %c0_41 = arith.constant 0 : index
    %66 = vector.load %arg2[%c1_39, %65, %c0_40, %c0_41] : memref<3x8x2x96xf32, #tpu.memory_space<vmem>>, vector<1x1x2x96xf32>
    %67 = vector.shape_cast %66 : vector<1x1x2x96xf32> to vector<2x96xf32>
    %68 = arith.addf %67, %53 : vector<2x96xf32>
    %69 = arith.negf %68 : vector<2x96xf32>
    %70 = math.exp %69 : vector<2x96xf32>
    %cst_42 = arith.constant 1.000000e+00 : f32
    %71 = vector.broadcast %cst_42 : f32 to vector<2x96xf32>
    %72 = arith.addf %71, %70 : vector<2x96xf32>
    %73 = arith.divf %71, %72 : vector<2x96xf32>
    %c2_43 = arith.constant 2 : index
    %74 = arith.index_cast %c1_i32 : i32 to index
    %c0_44 = arith.constant 0 : index
    %c0_45 = arith.constant 0 : index
    %75 = vector.load %arg2[%c2_43, %74, %c0_44, %c0_45] : memref<3x8x2x96xf32, #tpu.memory_space<vmem>>, vector<1x1x2x96xf32>
    %76 = vector.shape_cast %75 : vector<1x1x2x96xf32> to vector<2x96xf32>
    %77 = arith.mulf %64, %55 : vector<2x96xf32>
    %78 = arith.addf %76, %77 : vector<2x96xf32>
    %79 = math.tanh %78 : vector<2x96xf32>
    %cst_46 = arith.constant 1.000000e+00 : f32
    %80 = vector.broadcast %cst_46 : f32 to vector<2x96xf32>
    %81 = arith.subf %80, %73 : vector<2x96xf32>
    %82 = arith.mulf %81, %79 : vector<2x96xf32>
    %83 = arith.mulf %73, %51 : vector<2x96xf32>
    %84 = arith.addf %82, %83 : vector<2x96xf32>
    %c0_47 = arith.constant 0 : index
    %c0_48 = arith.constant 0 : index
    %85 = vector.load %arg6[%c0_47, %c0_48] : memref<2x96xf32, #tpu.memory_space<vmem>>, vector<2x96xf32>
    tpu.vector_store %arg6[%c0_47, %c0_48], %84 {strides = array<i32>} : memref<2x96xf32, #tpu.memory_space<vmem>>, vector<2x96xf32>,
    %86 = arith.index_cast %c1_i32 : i32 to index
    %c0_49 = arith.constant 0 : index
    %c0_50 = arith.constant 0 : index
    %87 = vector.load %arg5[%86, %c0_49, %c0_50] : memref<8x2x96xf32, #tpu.memory_space<vmem>>, vector<1x2x96xf32>
    %88 = vector.shape_cast %87 : vector<1x2x96xf32> to vector<2x96xf32>
    %89 = vector.shape_cast %84 : vector<2x96xf32> to vector<1x2x96xf32>
    tpu.vector_store %arg5[%86, %c0_49, %c0_50], %89 {strides = array<i32>} : memref<8x2x96xf32, #tpu.memory_space<vmem>>, vector<1x2x96xf32>,
    %c2_i32 = arith.constant 2 : i32
    %c0_51 = arith.constant 0 : index
    %c0_52 = arith.constant 0 : index
    %90 = vector.load %arg6[%c0_51, %c0_52] : memref<2x96xf32, #tpu.memory_space<vmem>>, vector<2x96xf32>
    %cst_53 = arith.constant dense<0.000000e+00> : vector<2x96xf32>
    %91 = tpu.matmul %90, %4, %cst_53 {dimension_numbers = #tpu.dot_dimension_numbers<[1], [0], [0], [1], [0, 0, 1, 1], [], []>} : vector<2x96xf32>, vector<96x96xf32>, vector<2x96xf32> -> vector<2x96xf32>
    %cst_54 = arith.constant dense<0.000000e+00> : vector<2x96xf32>
    %92 = tpu.matmul %90, %6, %cst_54 {dimension_numbers = #tpu.dot_dimension_numbers<[1], [0], [0], [1], [0, 0, 1, 1], [], []>} : vector<2x96xf32>, vector<96x96xf32>, vector<2x96xf32> -> vector<2x96xf32>
    %cst_55 = arith.constant dense<0.000000e+00> : vector<2x96xf32>
    %93 = tpu.matmul %90, %8, %cst_55 {dimension_numbers = #tpu.dot_dimension_numbers<[1], [0], [0], [1], [0, 0, 1, 1], [], []>} : vector<2x96xf32>, vector<96x96xf32>, vector<2x96xf32> -> vector<2x96xf32>
    %94 = arith.addf %93, %11 : vector<2x96xf32>
    %c0_56 = arith.constant 0 : index
    %95 = arith.index_cast %c2_i32 : i32 to index
    %c0_57 = arith.constant 0 : index
    %c0_58 = arith.constant 0 : index
    %96 = vector.load %arg2[%c0_56, %95, %c0_57, %c0_58] : memref<3x8x2x96xf32, #tpu.memory_space<vmem>>, vector<1x1x2x96xf32>
    %97 = vector.shape_cast %96 : vector<1x1x2x96xf32> to vector<2x96xf32>
    %98 = arith.addf %97, %91 : vector<2x96xf32>
    %99 = arith.negf %98 : vector<2x96xf32>
    %100 = math.exp %99 : vector<2x96xf32>
    %cst_59 = arith.constant 1.000000e+00 : f32
    %101 = vector.broadcast %cst_59 : f32 to vector<2x96xf32>
    %102 = arith.addf %101, %100 : vector<2x96xf32>
    %103 = arith.divf %101, %102 : vector<2x96xf32>
    %c1_60 = arith.constant 1 : index
    %104 = arith.index_cast %c2_i32 : i32 to index
    %c0_61 = arith.constant 0 : index
    %c0_62 = arith.constant 0 : index
    %105 = vector.load %arg2[%c1_60, %104, %c0_61, %c0_62] : memref<3x8x2x96xf32, #tpu.memory_space<vmem>>, vector<1x1x2x96xf32>
    %106 = vector.shape_cast %105 : vector<1x1x2x96xf32> to vector<2x96xf32>
    %107 = arith.addf %106, %92 : vector<2x96xf32>
    %108 = arith.negf %107 : vector<2x96xf32>
    %109 = math.exp %108 : vector<2x96xf32>
    %cst_63 = arith.constant 1.000000e+00 : f32
    %110 = vector.broadcast %cst_63 : f32 to vector<2x96xf32>
    %111 = arith.addf %110, %109 : vector<2x96xf32>
    %112 = arith.divf %110, %111 : vector<2x96xf32>
    %c2_64 = arith.constant 2 : index
    %113 = arith.index_cast %c2_i32 : i32 to index
    %c0_65 = arith.constant 0 : index
    %c0_66 = arith.constant 0 : index
    %114 = vector.load %arg2[%c2_64, %113, %c0_65, %c0_66] : memref<3x8x2x96xf32, #tpu.memory_space<vmem>>, vector<1x1x2x96xf32>
    %115 = vector.shape_cast %114 : vector<1x1x2x96xf32> to vector<2x96xf32>
    %116 = arith.mulf %103, %94 : vector<2x96xf32>
    %117 = arith.addf %115, %116 : vector<2x96xf32>
    %118 = math.tanh %117 : vector<2x96xf32>
    %cst_67 = arith.constant 1.000000e+00 : f32
    %119 = vector.broadcast %cst_67 : f32 to vector<2x96xf32>
    %120 = arith.subf %119, %112 : vector<2x96xf32>
    %121 = arith.mulf %120, %118 : vector<2x96xf32>
    %122 = arith.mulf %112, %90 : vector<2x96xf32>
    %123 = arith.addf %121, %122 : vector<2x96xf32>
    %c0_68 = arith.constant 0 : index
    %c0_69 = arith.constant 0 : index
    %124 = vector.load %arg6[%c0_68, %c0_69] : memref<2x96xf32, #tpu.memory_space<vmem>>, vector<2x96xf32>
    tpu.vector_store %arg6[%c0_68, %c0_69], %123 {strides = array<i32>} : memref<2x96xf32, #tpu.memory_space<vmem>>, vector<2x96xf32>,
    %125 = arith.index_cast %c2_i32 : i32 to index
    %c0_70 = arith.constant 0 : index
    %c0_71 = arith.constant 0 : index
    %126 = vector.load %arg5[%125, %c0_70, %c0_71] : memref<8x2x96xf32, #tpu.memory_space<vmem>>, vector<1x2x96xf32>
    %127 = vector.shape_cast %126 : vector<1x2x96xf32> to vector<2x96xf32>
    %128 = vector.shape_cast %123 : vector<2x96xf32> to vector<1x2x96xf32>
    tpu.vector_store %arg5[%125, %c0_70, %c0_71], %128 {strides = array<i32>} : memref<8x2x96xf32, #tpu.memory_space<vmem>>, vector<1x2x96xf32>,
    %c3_i32 = arith.constant 3 : i32
    %c0_72 = arith.constant 0 : index
    %c0_73 = arith.constant 0 : index
    %129 = vector.load %arg6[%c0_72, %c0_73] : memref<2x96xf32, #tpu.memory_space<vmem>>, vector<2x96xf32>
    %cst_74 = arith.constant dense<0.000000e+00> : vector<2x96xf32>
    %130 = tpu.matmul %129, %4, %cst_74 {dimension_numbers = #tpu.dot_dimension_numbers<[1], [0], [0], [1], [0, 0, 1, 1], [], []>} : vector<2x96xf32>, vector<96x96xf32>, vector<2x96xf32> -> vector<2x96xf32>
    %cst_75 = arith.constant dense<0.000000e+00> : vector<2x96xf32>
    %131 = tpu.matmul %129, %6, %cst_75 {dimension_numbers = #tpu.dot_dimension_numbers<[1], [0], [0], [1], [0, 0, 1, 1], [], []>} : vector<2x96xf32>, vector<96x96xf32>, vector<2x96xf32> -> vector<2x96xf32>
    %cst_76 = arith.constant dense<0.000000e+00> : vector<2x96xf32>
    %132 = tpu.matmul %129, %8, %cst_76 {dimension_numbers = #tpu.dot_dimension_numbers<[1], [0], [0], [1], [0, 0, 1, 1], [], []>} : vector<2x96xf32>, vector<96x96xf32>, vector<2x96xf32> -> vector<2x96xf32>
    %133 = arith.addf %132, %11 : vector<2x96xf32>
    %c0_77 = arith.constant 0 : index
    %134 = arith.index_cast %c3_i32 : i32 to index
    %c0_78 = arith.constant 0 : index
    %c0_79 = arith.constant 0 : index
    %135 = vector.load %arg2[%c0_77, %134, %c0_78, %c0_79] : memref<3x8x2x96xf32, #tpu.memory_space<vmem>>, vector<1x1x2x96xf32>
    %136 = vector.shape_cast %135 : vector<1x1x2x96xf32> to vector<2x96xf32>
    %137 = arith.addf %136, %130 : vector<2x96xf32>
    %138 = arith.negf %137 : vector<2x96xf32>
    %139 = math.exp %138 : vector<2x96xf32>
    %cst_80 = arith.constant 1.000000e+00 : f32
    %140 = vector.broadcast %cst_80 : f32 to vector<2x96xf32>
    %141 = arith.addf %140, %139 : vector<2x96xf32>
    %142 = arith.divf %140, %141 : vector<2x96xf32>
    %c1_81 = arith.constant 1 : index
    %143 = arith.index_cast %c3_i32 : i32 to index
    %c0_82 = arith.constant 0 : index
    %c0_83 = arith.constant 0 : index
    %144 = vector.load %arg2[%c1_81, %143, %c0_82, %c0_83] : memref<3x8x2x96xf32, #tpu.memory_space<vmem>>, vector<1x1x2x96xf32>
    %145 = vector.shape_cast %144 : vector<1x1x2x96xf32> to vector<2x96xf32>
    %146 = arith.addf %145, %131 : vector<2x96xf32>
    %147 = arith.negf %146 : vector<2x96xf32>
    %148 = math.exp %147 : vector<2x96xf32>
    %cst_84 = arith.constant 1.000000e+00 : f32
    %149 = vector.broadcast %cst_84 : f32 to vector<2x96xf32>
    %150 = arith.addf %149, %148 : vector<2x96xf32>
    %151 = arith.divf %149, %150 : vector<2x96xf32>
    %c2_85 = arith.constant 2 : index
    %152 = arith.index_cast %c3_i32 : i32 to index
    %c0_86 = arith.constant 0 : index
    %c0_87 = arith.constant 0 : index
    %153 = vector.load %arg2[%c2_85, %152, %c0_86, %c0_87] : memref<3x8x2x96xf32, #tpu.memory_space<vmem>>, vector<1x1x2x96xf32>
    %154 = vector.shape_cast %153 : vector<1x1x2x96xf32> to vector<2x96xf32>
    %155 = arith.mulf %142, %133 : vector<2x96xf32>
    %156 = arith.addf %154, %155 : vector<2x96xf32>
    %157 = math.tanh %156 : vector<2x96xf32>
    %cst_88 = arith.constant 1.000000e+00 : f32
    %158 = vector.broadcast %cst_88 : f32 to vector<2x96xf32>
    %159 = arith.subf %158, %151 : vector<2x96xf32>
    %160 = arith.mulf %159, %157 : vector<2x96xf32>
    %161 = arith.mulf %151, %129 : vector<2x96xf32>
    %162 = arith.addf %160, %161 : vector<2x96xf32>
    %c0_89 = arith.constant 0 : index
    %c0_90 = arith.constant 0 : index
    %163 = vector.load %arg6[%c0_89, %c0_90] : memref<2x96xf32, #tpu.memory_space<vmem>>, vector<2x96xf32>
    tpu.vector_store %arg6[%c0_89, %c0_90], %162 {strides = array<i32>} : memref<2x96xf32, #tpu.memory_space<vmem>>, vector<2x96xf32>,
    %164 = arith.index_cast %c3_i32 : i32 to index
    %c0_91 = arith.constant 0 : index
    %c0_92 = arith.constant 0 : index
    %165 = vector.load %arg5[%164, %c0_91, %c0_92] : memref<8x2x96xf32, #tpu.memory_space<vmem>>, vector<1x2x96xf32>
    %166 = vector.shape_cast %165 : vector<1x2x96xf32> to vector<2x96xf32>
    %167 = vector.shape_cast %162 : vector<2x96xf32> to vector<1x2x96xf32>
    tpu.vector_store %arg5[%164, %c0_91, %c0_92], %167 {strides = array<i32>} : memref<8x2x96xf32, #tpu.memory_space<vmem>>, vector<1x2x96xf32>,
    %c4_i32 = arith.constant 4 : i32
    %c0_93 = arith.constant 0 : index
    %c0_94 = arith.constant 0 : index
    %168 = vector.load %arg6[%c0_93, %c0_94] : memref<2x96xf32, #tpu.memory_space<vmem>>, vector<2x96xf32>
    %cst_95 = arith.constant dense<0.000000e+00> : vector<2x96xf32>
    %169 = tpu.matmul %168, %4, %cst_95 {dimension_numbers = #tpu.dot_dimension_numbers<[1], [0], [0], [1], [0, 0, 1, 1], [], []>} : vector<2x96xf32>, vector<96x96xf32>, vector<2x96xf32> -> vector<2x96xf32>
    %cst_96 = arith.constant dense<0.000000e+00> : vector<2x96xf32>
    %170 = tpu.matmul %168, %6, %cst_96 {dimension_numbers = #tpu.dot_dimension_numbers<[1], [0], [0], [1], [0, 0, 1, 1], [], []>} : vector<2x96xf32>, vector<96x96xf32>, vector<2x96xf32> -> vector<2x96xf32>
    %cst_97 = arith.constant dense<0.000000e+00> : vector<2x96xf32>
    %171 = tpu.matmul %168, %8, %cst_97 {dimension_numbers = #tpu.dot_dimension_numbers<[1], [0], [0], [1], [0, 0, 1, 1], [], []>} : vector<2x96xf32>, vector<96x96xf32>, vector<2x96xf32> -> vector<2x96xf32>
    %172 = arith.addf %171, %11 : vector<2x96xf32>
    %c0_98 = arith.constant 0 : index
    %173 = arith.index_cast %c4_i32 : i32 to index
    %c0_99 = arith.constant 0 : index
    %c0_100 = arith.constant 0 : index
    %174 = vector.load %arg2[%c0_98, %173, %c0_99, %c0_100] : memref<3x8x2x96xf32, #tpu.memory_space<vmem>>, vector<1x1x2x96xf32>
    %175 = vector.shape_cast %174 : vector<1x1x2x96xf32> to vector<2x96xf32>
    %176 = arith.addf %175, %169 : vector<2x96xf32>
    %177 = arith.negf %176 : vector<2x96xf32>
    %178 = math.exp %177 : vector<2x96xf32>
    %cst_101 = arith.constant 1.000000e+00 : f32
    %179 = vector.broadcast %cst_101 : f32 to vector<2x96xf32>
    %180 = arith.addf %179, %178 : vector<2x96xf32>
    %181 = arith.divf %179, %180 : vector<2x96xf32>
    %c1_102 = arith.constant 1 : index
    %182 = arith.index_cast %c4_i32 : i32 to index
    %c0_103 = arith.constant 0 : index
    %c0_104 = arith.constant 0 : index
    %183 = vector.load %arg2[%c1_102, %182, %c0_103, %c0_104] : memref<3x8x2x96xf32, #tpu.memory_space<vmem>>, vector<1x1x2x96xf32>
    %184 = vector.shape_cast %183 : vector<1x1x2x96xf32> to vector<2x96xf32>
    %185 = arith.addf %184, %170 : vector<2x96xf32>
    %186 = arith.negf %185 : vector<2x96xf32>
    %187 = math.exp %186 : vector<2x96xf32>
    %cst_105 = arith.constant 1.000000e+00 : f32
    %188 = vector.broadcast %cst_105 : f32 to vector<2x96xf32>
    %189 = arith.addf %188, %187 : vector<2x96xf32>
    %190 = arith.divf %188, %189 : vector<2x96xf32>
    %c2_106 = arith.constant 2 : index
    %191 = arith.index_cast %c4_i32 : i32 to index
    %c0_107 = arith.constant 0 : index
    %c0_108 = arith.constant 0 : index
    %192 = vector.load %arg2[%c2_106, %191, %c0_107, %c0_108] : memref<3x8x2x96xf32, #tpu.memory_space<vmem>>, vector<1x1x2x96xf32>
    %193 = vector.shape_cast %192 : vector<1x1x2x96xf32> to vector<2x96xf32>
    %194 = arith.mulf %181, %172 : vector<2x96xf32>
    %195 = arith.addf %193, %194 : vector<2x96xf32>
    %196 = math.tanh %195 : vector<2x96xf32>
    %cst_109 = arith.constant 1.000000e+00 : f32
    %197 = vector.broadcast %cst_109 : f32 to vector<2x96xf32>
    %198 = arith.subf %197, %190 : vector<2x96xf32>
    %199 = arith.mulf %198, %196 : vector<2x96xf32>
    %200 = arith.mulf %190, %168 : vector<2x96xf32>
    %201 = arith.addf %199, %200 : vector<2x96xf32>
    %c0_110 = arith.constant 0 : index
    %c0_111 = arith.constant 0 : index
    %202 = vector.load %arg6[%c0_110, %c0_111] : memref<2x96xf32, #tpu.memory_space<vmem>>, vector<2x96xf32>
    tpu.vector_store %arg6[%c0_110, %c0_111], %201 {strides = array<i32>} : memref<2x96xf32, #tpu.memory_space<vmem>>, vector<2x96xf32>,
    %203 = arith.index_cast %c4_i32 : i32 to index
    %c0_112 = arith.constant 0 : index
    %c0_113 = arith.constant 0 : index
    %204 = vector.load %arg5[%203, %c0_112, %c0_113] : memref<8x2x96xf32, #tpu.memory_space<vmem>>, vector<1x2x96xf32>
    %205 = vector.shape_cast %204 : vector<1x2x96xf32> to vector<2x96xf32>
    %206 = vector.shape_cast %201 : vector<2x96xf32> to vector<1x2x96xf32>
    tpu.vector_store %arg5[%203, %c0_112, %c0_113], %206 {strides = array<i32>} : memref<8x2x96xf32, #tpu.memory_space<vmem>>, vector<1x2x96xf32>,
    %c5_i32 = arith.constant 5 : i32
    %c0_114 = arith.constant 0 : index
    %c0_115 = arith.constant 0 : index
    %207 = vector.load %arg6[%c0_114, %c0_115] : memref<2x96xf32, #tpu.memory_space<vmem>>, vector<2x96xf32>
    %cst_116 = arith.constant dense<0.000000e+00> : vector<2x96xf32>
    %208 = tpu.matmul %207, %4, %cst_116 {dimension_numbers = #tpu.dot_dimension_numbers<[1], [0], [0], [1], [0, 0, 1, 1], [], []>} : vector<2x96xf32>, vector<96x96xf32>, vector<2x96xf32> -> vector<2x96xf32>
    %cst_117 = arith.constant dense<0.000000e+00> : vector<2x96xf32>
    %209 = tpu.matmul %207, %6, %cst_117 {dimension_numbers = #tpu.dot_dimension_numbers<[1], [0], [0], [1], [0, 0, 1, 1], [], []>} : vector<2x96xf32>, vector<96x96xf32>, vector<2x96xf32> -> vector<2x96xf32>
    %cst_118 = arith.constant dense<0.000000e+00> : vector<2x96xf32>
    %210 = tpu.matmul %207, %8, %cst_118 {dimension_numbers = #tpu.dot_dimension_numbers<[1], [0], [0], [1], [0, 0, 1, 1], [], []>} : vector<2x96xf32>, vector<96x96xf32>, vector<2x96xf32> -> vector<2x96xf32>
    %211 = arith.addf %210, %11 : vector<2x96xf32>
    %c0_119 = arith.constant 0 : index
    %212 = arith.index_cast %c5_i32 : i32 to index
    %c0_120 = arith.constant 0 : index
    %c0_121 = arith.constant 0 : index
    %213 = vector.load %arg2[%c0_119, %212, %c0_120, %c0_121] : memref<3x8x2x96xf32, #tpu.memory_space<vmem>>, vector<1x1x2x96xf32>
    %214 = vector.shape_cast %213 : vector<1x1x2x96xf32> to vector<2x96xf32>
    %215 = arith.addf %214, %208 : vector<2x96xf32>
    %216 = arith.negf %215 : vector<2x96xf32>
    %217 = math.exp %216 : vector<2x96xf32>
    %cst_122 = arith.constant 1.000000e+00 : f32
    %218 = vector.broadcast %cst_122 : f32 to vector<2x96xf32>
    %219 = arith.addf %218, %217 : vector<2x96xf32>
    %220 = arith.divf %218, %219 : vector<2x96xf32>
    %c1_123 = arith.constant 1 : index
    %221 = arith.index_cast %c5_i32 : i32 to index
    %c0_124 = arith.constant 0 : index
    %c0_125 = arith.constant 0 : index
    %222 = vector.load %arg2[%c1_123, %221, %c0_124, %c0_125] : memref<3x8x2x96xf32, #tpu.memory_space<vmem>>, vector<1x1x2x96xf32>
    %223 = vector.shape_cast %222 : vector<1x1x2x96xf32> to vector<2x96xf32>
    %224 = arith.addf %223, %209 : vector<2x96xf32>
    %225 = arith.negf %224 : vector<2x96xf32>
    %226 = math.exp %225 : vector<2x96xf32>
    %cst_126 = arith.constant 1.000000e+00 : f32
    %227 = vector.broadcast %cst_126 : f32 to vector<2x96xf32>
    %228 = arith.addf %227, %226 : vector<2x96xf32>
    %229 = arith.divf %227, %228 : vector<2x96xf32>
    %c2_127 = arith.constant 2 : index
    %230 = arith.index_cast %c5_i32 : i32 to index
    %c0_128 = arith.constant 0 : index
    %c0_129 = arith.constant 0 : index
    %231 = vector.load %arg2[%c2_127, %230, %c0_128, %c0_129] : memref<3x8x2x96xf32, #tpu.memory_space<vmem>>, vector<1x1x2x96xf32>
    %232 = vector.shape_cast %231 : vector<1x1x2x96xf32> to vector<2x96xf32>
    %233 = arith.mulf %220, %211 : vector<2x96xf32>
    %234 = arith.addf %232, %233 : vector<2x96xf32>
    %235 = math.tanh %234 : vector<2x96xf32>
    %cst_130 = arith.constant 1.000000e+00 : f32
    %236 = vector.broadcast %cst_130 : f32 to vector<2x96xf32>
    %237 = arith.subf %236, %229 : vector<2x96xf32>
    %238 = arith.mulf %237, %235 : vector<2x96xf32>
    %239 = arith.mulf %229, %207 : vector<2x96xf32>
    %240 = arith.addf %238, %239 : vector<2x96xf32>
    %c0_131 = arith.constant 0 : index
    %c0_132 = arith.constant 0 : index
    %241 = vector.load %arg6[%c0_131, %c0_132] : memref<2x96xf32, #tpu.memory_space<vmem>>, vector<2x96xf32>
    tpu.vector_store %arg6[%c0_131, %c0_132], %240 {strides = array<i32>} : memref<2x96xf32, #tpu.memory_space<vmem>>, vector<2x96xf32>,
    %242 = arith.index_cast %c5_i32 : i32 to index
    %c0_133 = arith.constant 0 : index
    %c0_134 = arith.constant 0 : index
    %243 = vector.load %arg5[%242, %c0_133, %c0_134] : memref<8x2x96xf32, #tpu.memory_space<vmem>>, vector<1x2x96xf32>
    %244 = vector.shape_cast %243 : vector<1x2x96xf32> to vector<2x96xf32>
    %245 = vector.shape_cast %240 : vector<2x96xf32> to vector<1x2x96xf32>
    tpu.vector_store %arg5[%242, %c0_133, %c0_134], %245 {strides = array<i32>} : memref<8x2x96xf32, #tpu.memory_space<vmem>>, vector<1x2x96xf32>,
    %c6_i32 = arith.constant 6 : i32
    %c0_135 = arith.constant 0 : index
    %c0_136 = arith.constant 0 : index
    %246 = vector.load %arg6[%c0_135, %c0_136] : memref<2x96xf32, #tpu.memory_space<vmem>>, vector<2x96xf32>
    %cst_137 = arith.constant dense<0.000000e+00> : vector<2x96xf32>
    %247 = tpu.matmul %246, %4, %cst_137 {dimension_numbers = #tpu.dot_dimension_numbers<[1], [0], [0], [1], [0, 0, 1, 1], [], []>} : vector<2x96xf32>, vector<96x96xf32>, vector<2x96xf32> -> vector<2x96xf32>
    %cst_138 = arith.constant dense<0.000000e+00> : vector<2x96xf32>
    %248 = tpu.matmul %246, %6, %cst_138 {dimension_numbers = #tpu.dot_dimension_numbers<[1], [0], [0], [1], [0, 0, 1, 1], [], []>} : vector<2x96xf32>, vector<96x96xf32>, vector<2x96xf32> -> vector<2x96xf32>
    %cst_139 = arith.constant dense<0.000000e+00> : vector<2x96xf32>
    %249 = tpu.matmul %246, %8, %cst_139 {dimension_numbers = #tpu.dot_dimension_numbers<[1], [0], [0], [1], [0, 0, 1, 1], [], []>} : vector<2x96xf32>, vector<96x96xf32>, vector<2x96xf32> -> vector<2x96xf32>
    %250 = arith.addf %249, %11 : vector<2x96xf32>
    %c0_140 = arith.constant 0 : index
    %251 = arith.index_cast %c6_i32 : i32 to index
    %c0_141 = arith.constant 0 : index
    %c0_142 = arith.constant 0 : index
    %252 = vector.load %arg2[%c0_140, %251, %c0_141, %c0_142] : memref<3x8x2x96xf32, #tpu.memory_space<vmem>>, vector<1x1x2x96xf32>
    %253 = vector.shape_cast %252 : vector<1x1x2x96xf32> to vector<2x96xf32>
    %254 = arith.addf %253, %247 : vector<2x96xf32>
    %255 = arith.negf %254 : vector<2x96xf32>
    %256 = math.exp %255 : vector<2x96xf32>
    %cst_143 = arith.constant 1.000000e+00 : f32
    %257 = vector.broadcast %cst_143 : f32 to vector<2x96xf32>
    %258 = arith.addf %257, %256 : vector<2x96xf32>
    %259 = arith.divf %257, %258 : vector<2x96xf32>
    %c1_144 = arith.constant 1 : index
    %260 = arith.index_cast %c6_i32 : i32 to index
    %c0_145 = arith.constant 0 : index
    %c0_146 = arith.constant 0 : index
    %261 = vector.load %arg2[%c1_144, %260, %c0_145, %c0_146] : memref<3x8x2x96xf32, #tpu.memory_space<vmem>>, vector<1x1x2x96xf32>
    %262 = vector.shape_cast %261 : vector<1x1x2x96xf32> to vector<2x96xf32>
    %263 = arith.addf %262, %248 : vector<2x96xf32>
    %264 = arith.negf %263 : vector<2x96xf32>
    %265 = math.exp %264 : vector<2x96xf32>
    %cst_147 = arith.constant 1.000000e+00 : f32
    %266 = vector.broadcast %cst_147 : f32 to vector<2x96xf32>
    %267 = arith.addf %266, %265 : vector<2x96xf32>
    %268 = arith.divf %266, %267 : vector<2x96xf32>
    %c2_148 = arith.constant 2 : index
    %269 = arith.index_cast %c6_i32 : i32 to index
    %c0_149 = arith.constant 0 : index
    %c0_150 = arith.constant 0 : index
    %270 = vector.load %arg2[%c2_148, %269, %c0_149, %c0_150] : memref<3x8x2x96xf32, #tpu.memory_space<vmem>>, vector<1x1x2x96xf32>
    %271 = vector.shape_cast %270 : vector<1x1x2x96xf32> to vector<2x96xf32>
    %272 = arith.mulf %259, %250 : vector<2x96xf32>
    %273 = arith.addf %271, %272 : vector<2x96xf32>
    %274 = math.tanh %273 : vector<2x96xf32>
    %cst_151 = arith.constant 1.000000e+00 : f32
    %275 = vector.broadcast %cst_151 : f32 to vector<2x96xf32>
    %276 = arith.subf %275, %268 : vector<2x96xf32>
    %277 = arith.mulf %276, %274 : vector<2x96xf32>
    %278 = arith.mulf %268, %246 : vector<2x96xf32>
    %279 = arith.addf %277, %278 : vector<2x96xf32>
    %c0_152 = arith.constant 0 : index
    %c0_153 = arith.constant 0 : index
    %280 = vector.load %arg6[%c0_152, %c0_153] : memref<2x96xf32, #tpu.memory_space<vmem>>, vector<2x96xf32>
    tpu.vector_store %arg6[%c0_152, %c0_153], %279 {strides = array<i32>} : memref<2x96xf32, #tpu.memory_space<vmem>>, vector<2x96xf32>,
    %281 = arith.index_cast %c6_i32 : i32 to index
    %c0_154 = arith.constant 0 : index
    %c0_155 = arith.constant 0 : index
    %282 = vector.load %arg5[%281, %c0_154, %c0_155] : memref<8x2x96xf32, #tpu.memory_space<vmem>>, vector<1x2x96xf32>
    %283 = vector.shape_cast %282 : vector<1x2x96xf32> to vector<2x96xf32>
    %284 = vector.shape_cast %279 : vector<2x96xf32> to vector<1x2x96xf32>
    tpu.vector_store %arg5[%281, %c0_154, %c0_155], %284 {strides = array<i32>} : memref<8x2x96xf32, #tpu.memory_space<vmem>>, vector<1x2x96xf32>,
    %c7_i32 = arith.constant 7 : i32
    %c0_156 = arith.constant 0 : index
    %c0_157 = arith.constant 0 : index
    %285 = vector.load %arg6[%c0_156, %c0_157] : memref<2x96xf32, #tpu.memory_space<vmem>>, vector<2x96xf32>
    %cst_158 = arith.constant dense<0.000000e+00> : vector<2x96xf32>
    %286 = tpu.matmul %285, %4, %cst_158 {dimension_numbers = #tpu.dot_dimension_numbers<[1], [0], [0], [1], [0, 0, 1, 1], [], []>} : vector<2x96xf32>, vector<96x96xf32>, vector<2x96xf32> -> vector<2x96xf32>
    %cst_159 = arith.constant dense<0.000000e+00> : vector<2x96xf32>
    %287 = tpu.matmul %285, %6, %cst_159 {dimension_numbers = #tpu.dot_dimension_numbers<[1], [0], [0], [1], [0, 0, 1, 1], [], []>} : vector<2x96xf32>, vector<96x96xf32>, vector<2x96xf32> -> vector<2x96xf32>
    %cst_160 = arith.constant dense<0.000000e+00> : vector<2x96xf32>
    %288 = tpu.matmul %285, %8, %cst_160 {dimension_numbers = #tpu.dot_dimension_numbers<[1], [0], [0], [1], [0, 0, 1, 1], [], []>} : vector<2x96xf32>, vector<96x96xf32>, vector<2x96xf32> -> vector<2x96xf32>
    %289 = arith.addf %288, %11 : vector<2x96xf32>
    %c0_161 = arith.constant 0 : index
    %290 = arith.index_cast %c7_i32 : i32 to index
    %c0_162 = arith.constant 0 : index
    %c0_163 = arith.constant 0 : index
    %291 = vector.load %arg2[%c0_161, %290, %c0_162, %c0_163] : memref<3x8x2x96xf32, #tpu.memory_space<vmem>>, vector<1x1x2x96xf32>
    %292 = vector.shape_cast %291 : vector<1x1x2x96xf32> to vector<2x96xf32>
    %293 = arith.addf %292, %286 : vector<2x96xf32>
    %294 = arith.negf %293 : vector<2x96xf32>
    %295 = math.exp %294 : vector<2x96xf32>
    %cst_164 = arith.constant 1.000000e+00 : f32
    %296 = vector.broadcast %cst_164 : f32 to vector<2x96xf32>
    %297 = arith.addf %296, %295 : vector<2x96xf32>
    %298 = arith.divf %296, %297 : vector<2x96xf32>
    %c1_165 = arith.constant 1 : index
    %299 = arith.index_cast %c7_i32 : i32 to index
    %c0_166 = arith.constant 0 : index
    %c0_167 = arith.constant 0 : index
    %300 = vector.load %arg2[%c1_165, %299, %c0_166, %c0_167] : memref<3x8x2x96xf32, #tpu.memory_space<vmem>>, vector<1x1x2x96xf32>
    %301 = vector.shape_cast %300 : vector<1x1x2x96xf32> to vector<2x96xf32>
    %302 = arith.addf %301, %287 : vector<2x96xf32>
    %303 = arith.negf %302 : vector<2x96xf32>
    %304 = math.exp %303 : vector<2x96xf32>
    %cst_168 = arith.constant 1.000000e+00 : f32
    %305 = vector.broadcast %cst_168 : f32 to vector<2x96xf32>
    %306 = arith.addf %305, %304 : vector<2x96xf32>
    %307 = arith.divf %305, %306 : vector<2x96xf32>
    %c2_169 = arith.constant 2 : index
    %308 = arith.index_cast %c7_i32 : i32 to index
    %c0_170 = arith.constant 0 : index
    %c0_171 = arith.constant 0 : index
    %309 = vector.load %arg2[%c2_169, %308, %c0_170, %c0_171] : memref<3x8x2x96xf32, #tpu.memory_space<vmem>>, vector<1x1x2x96xf32>
    %310 = vector.shape_cast %309 : vector<1x1x2x96xf32> to vector<2x96xf32>
    %311 = arith.mulf %298, %289 : vector<2x96xf32>
    %312 = arith.addf %310, %311 : vector<2x96xf32>
    %313 = math.tanh %312 : vector<2x96xf32>
    %cst_172 = arith.constant 1.000000e+00 : f32
    %314 = vector.broadcast %cst_172 : f32 to vector<2x96xf32>
    %315 = arith.subf %314, %307 : vector<2x96xf32>
    %316 = arith.mulf %315, %313 : vector<2x96xf32>
    %317 = arith.mulf %307, %285 : vector<2x96xf32>
    %318 = arith.addf %316, %317 : vector<2x96xf32>
    %c0_173 = arith.constant 0 : index
    %c0_174 = arith.constant 0 : index
    %319 = vector.load %arg6[%c0_173, %c0_174] : memref<2x96xf32, #tpu.memory_space<vmem>>, vector<2x96xf32>
    tpu.vector_store %arg6[%c0_173, %c0_174], %318 {strides = array<i32>} : memref<2x96xf32, #tpu.memory_space<vmem>>, vector<2x96xf32>,
    %320 = arith.index_cast %c7_i32 : i32 to index
    %c0_175 = arith.constant 0 : index
    %c0_176 = arith.constant 0 : index
    %321 = vector.load %arg5[%320, %c0_175, %c0_176] : memref<8x2x96xf32, #tpu.memory_space<vmem>>, vector<1x2x96xf32>
    %322 = vector.shape_cast %321 : vector<1x2x96xf32> to vector<2x96xf32>
    %323 = vector.shape_cast %318 : vector<2x96xf32> to vector<1x2x96xf32>
    tpu.vector_store %arg5[%320, %c0_175, %c0_176], %323 {strides = array<i32>} : memref<8x2x96xf32, #tpu.memory_space<vmem>>, vector<1x2x96xf32>,
    %c8_i32 = arith.constant 8 : i32
    return
  }
  func.func @transform_0(%arg0: i32, %arg1: i32) -> (i32, i32, i32, i32) {
    %c0_i32 = arith.constant 0 : i32
    %c0_i32_0 = arith.constant 0 : i32
    %c0_i32_1 = arith.constant 0 : i32
    return %c0_i32, %arg1, %arg0, %c0_i32_0 : i32, i32, i32, i32
  }
  func.func @transform_1(%arg0: i32, %arg1: i32) -> (i32, i32, i32) {
    %c0_i32 = arith.constant 0 : i32
    %c0_i32_0 = arith.constant 0 : i32
    %c0_i32_1 = arith.constant 0 : i32
    %c0_i32_2 = arith.constant 0 : i32
    return %c0_i32, %c0_i32_0, %c0_i32_1 : i32, i32, i32
  }
  func.func @transform_2(%arg0: i32, %arg1: i32) -> (i32, i32) {
    %c0_i32 = arith.constant 0 : i32
    %c0_i32_0 = arith.constant 0 : i32
    %c0_i32_1 = arith.constant 0 : i32
    return %c0_i32, %c0_i32_0 : i32, i32
  }
  func.func @transform_3(%arg0: i32, %arg1: i32) -> (i32, i32, i32) {
    %c0_i32 = arith.constant 0 : i32
    %c0_i32_0 = arith.constant 0 : i32
    return %arg1, %arg0, %c0_i32 : i32, i32, i32
  }
}

</mosaic_0001>

<llo_original>
// kernel: squeeze.14
$region0: #{squeeze.14}
  %s0 = inlined_call_operand.vmem [shape: f32[1,3,32], index: 0, kind: input, shape index: {}]
  %s1 = inlined_call_operand.vmem [shape: f32[1,96], index: 1, kind: output, shape index: {}]
  $region1: #{squeeze.14} parent=0
    #allocation0 [shape = 'u8[4096]{0}', space=vmem, size = 0x1000, scoped, tag = 'scoped mem for output reshape']
    #allocation1 [shape = 'u8[4096]{0}', space=vmem, size = 0x1000, scoped, tag = 'scoped mem for input reshape']
    %s3 = sshll.u32 1, 4
    %s4 = ssub.s32 %s3, 1
    %v5 = vld [vmem:[%s0] sm:%s4]
    %6 = vst [vmem:[#allocation1] sm:%s4] %v5
    %v7 = vld [vmem:[#allocation1] sm:$0x1]
    %vm8 = vcmask 261120
    %9 = vst.msk [vmem:[#allocation0] sm:$0x1] %vm8, %v7
    %s10 = scalar_lea.vmem [#allocation1], 2
    %v11 = vld [vmem:[%s10] sm:$0x1]
    %12 = vrot.lane.b32.xlu0 %v11, 64
    %v13 = vpop.permute.xlu0 %12
    %vm14 = vcmask 785920
    %15 = vst.msk [vmem:[#allocation0] sm:$0x1] %vm14, %v13
    %s16 = scalar_lea.vmem [#allocation1], 1
    %v17 = vld [vmem:[%s16] sm:$0x1]
    %18 = vrot.lane.b32.xlu0 %v17, 32
    %v19 = vpop.permute.xlu0 %18
    %vm20 = vcmask 523520
    %21 = vst.msk [vmem:[#allocation0] sm:$0x1] %vm20, %v19
    %s23 = sshll.u32 1, 1
    %s24 = ssub.s32 %s23, 1
    %v26 = vld [vmem:[#allocation0] sm:%s24]
    %s27 = sshll.u32 1, 1
    %s28 = ssub.s32 %s27, 1
    %29 = vst [vmem:[%s1] sm:%s28] %v26

// kernel: krnn_encoder_forward.2
$region0: #{krnn_encoder_forward.2}
  #allocation0 [shape = 'u32[]', space=smem, size = 0x4, offset = 0x4, fixed_abs, tag = 'smem constant byte address 0x4 - core index']
  #allocation1 [shape = 'u32[144,128]{1,0:T(1,128)}', space=vmem, size = 0x12000, scoped, tag = 'internal scratch']
  #allocation2 [shape = 'f32[2,96]{1,0:T(2,128)}', space=vmem, size = 0x400, scoped, tag = 'scratch operand']
  %s0 = inlined_call_operand.vmem [shape: f32[3,8,2,96], index: 0, kind: input, shape index: {}]
  %s1 = inlined_call_operand.vmem [shape: f32[3,96,96], index: 1, kind: input, shape index: {}]
  %s2 = inlined_call_operand.vmem [shape: f32[1,96], index: 2, kind: input, shape index: {}]
  %s3 = inlined_call_operand.vmem [shape: f32[8,2,96], index: 3, kind: output, shape index: {}]
  %s4 = sld [smem:[#allocation0]]
  $region26: #{krnn_encoder_forward.2} parent=0
    _
  %s6 = ssub.s32 1, %s4
  %s7 = scalar_select 0, %s6, %s4
  // Predicated region
  $region2: #{krnn_encoder_forward.2} parent=0 // pred_check
    _
  $region3: #{krnn_encoder_forward.2} parent=0 // pred_check_branch
    %9 = sbr.rel (0) target = $region5
  $region4: #{krnn_encoder_forward.2} parent=0 // pred_region
    _
  $region5: #{krnn_encoder_forward.2} parent=0 // pred_fallthru
    _
  // Predicated region
  $region6: #{krnn_encoder_forward.2} parent=0 // pred_check
    _
  $region7: #{krnn_encoder_forward.2} parent=0 // pred_check_branch
    %11 = sbr.rel (0) target = $region9
  $region8: #{krnn_encoder_forward.2} parent=0 // pred_region
    _
  $region9: #{krnn_encoder_forward.2} parent=0 // pred_fallthru
    _
  // Predicated region
  $region10: #{krnn_encoder_forward.2} parent=0 // pred_check
    _
  $region11: #{krnn_encoder_forward.2} parent=0 // pred_check_branch
    %13 = sbr.rel (0) target = $region13
  $region12: #{krnn_encoder_forward.2} parent=0 // pred_region
    _
  $region13: #{krnn_encoder_forward.2} parent=0 // pred_fallthru
    _
  %p14 = scmp.eq.s32.totalorder 0, 0
  // Predicated region
  $region14: #{krnn_encoder_forward.2} parent=0 // pred_check
    %p15 = pneg %p14
  $region15: #{krnn_encoder_forward.2} parent=0 // pred_check_branch
    %17 = sbr.rel (%p15) target = $region17
  $region16: #{krnn_encoder_forward.2} parent=0 // pred_region
    %vm18 = vcmask 779264
    %19 = vst.msk [vmem:[#allocation2] sm:$0x3] %vm18, 0.0
  $region17: #{krnn_encoder_forward.2} parent=0 // pred_fallthru
    _
  %v20 = vld [vmem:[%s1] sm:$0xff]
  %v21 = vld [vmem:[%s1 + $0x8] sm:$0xff]
  %v22 = vld [vmem:[%s1 + $0x10] sm:$0xff]
  %v23 = vld [vmem:[%s1 + $0x18] sm:$0xff]
  %v24 = vld [vmem:[%s1 + $0x20] sm:$0xff]
  %v25 = vld [vmem:[%s1 + $0x28] sm:$0xff]
  %v26 = vld [vmem:[%s1 + $0x30] sm:$0xff]
  %v27 = vld [vmem:[%s1 + $0x38] sm:$0xff]
  %v28 = vld [vmem:[%s1 + $0x40] sm:$0xff]
  %v29 = vld [vmem:[%s1 + $0x48] sm:$0xff]
  %v30 = vld [vmem:[%s1 + $0x50] sm:$0xff]
  %v31 = vld [vmem:[%s1 + $0x58] sm:$0xff]
  %s32 = scalar_lea.vmem %s1, 96
  %v33 = vld [vmem:[%s32] sm:$0xff]
  %v34 = vld [vmem:[%s32 + $0x8] sm:$0xff]
  %v35 = vld [vmem:[%s32 + $0x10] sm:$0xff]
  %v36 = vld [vmem:[%s32 + $0x18] sm:$0xff]
  %v37 = vld [vmem:[%s32 + $0x20] sm:$0xff]
  %v38 = vld [vmem:[%s32 + $0x28] sm:$0xff]
  %v39 = vld [vmem:[%s32 + $0x30] sm:$0xff]
  %v40 = vld [vmem:[%s32 + $0x38] sm:$0xff]
  %v41 = vld [vmem:[%s32 + $0x40] sm:$0xff]
  %v42 = vld [vmem:[%s32 + $0x48] sm:$0xff]
  %v43 = vld [vmem:[%s32 + $0x50] sm:$0xff]
  %v44 = vld [vmem:[%s32 + $0x58] sm:$0xff]
  %s45 = scalar_lea.vmem %s1, 192
  %v46 = vld [vmem:[%s45] sm:$0xff]
  %v47 = vld [vmem:[%s45 + $0x8] sm:$0xff]
  %v48 = vld [vmem:[%s45 + $0x10] sm:$0xff]
  %v49 = vld [vmem:[%s45 + $0x18] sm:$0xff]
  %v50 = vld [vmem:[%s45 + $0x20] sm:$0xff]
  %v51 = vld [vmem:[%s45 + $0x28] sm:$0xff]
  %v52 = vld [vmem:[%s45 + $0x30] sm:$0xff]
  %v53 = vld [vmem:[%s45 + $0x38] sm:$0xff]
  %v54 = vld [vmem:[%s45 + $0x40] sm:$0xff]
  %v55 = vld [vmem:[%s45 + $0x48] sm:$0xff]
  %v56 = vld [vmem:[%s45 + $0x50] sm:$0xff]
  %v57 = vld [vmem:[%s45 + $0x58] sm:$0xff]
  %v58 = vld [vmem:[%s2] sm:$0x1]
  %v60 = vlaneseq
  %v61 = vshrl.u32 %v60, 7
  %v62 = vsub.s32 0, %v61
  %v63 = vrot.slane %v58, %v62
  %v65 = vld [vmem:[#allocation2] sm:$0x3]
  %vm66 = vcmask 785408
  %v68 = vsel %vm66, %v65, 0
  %70 = vmatprep.subr.mxu0 0.0
  %71 = vmatpush1.msra.mxu0 0.0
  %72 = vmatprep.subr.mxu0 0.0
  %73 = vmatpush1.msra.mxu0 0.0
  %74 = vmatprep.subr.mxu0 0.0
  %75 = vmatpush1.msra.mxu0 0.0
  %76 = vmatprep.subr.mxu0 0.0
  %77 = vmatpush1.msra.mxu0 0.0
  %78 = vmatprep.subr.mxu0 0.0
  %79 = vmatpush1.msra.mxu0 %v31
  %80 = vmatprep.subr.mxu0 0.0
  %81 = vmatpush1.msra.mxu0 %v30
  %82 = vmatprep.subr.mxu0 0.0
  %83 = vmatpush1.msra.mxu0 %v29
  %84 = vmatprep.subr.mxu0 0.0
  %85 = vmatpush1.msra.mxu0 %v28
  %86 = vmatprep.subr.mxu0 0.0
  %87 = vmatpush1.msra.mxu0 %v27
  %88 = vmatprep.subr.mxu0 0.0
  %89 = vmatpush1.msra.mxu0 %v26
  %90 = vmatprep.subr.mxu0 0.0
  %91 = vmatpush1.msra.mxu0 %v25
  %92 = vmatprep.subr.mxu0 0.0
  %93 = vmatpush1.msra.mxu0 %v24
  %94 = vmatprep.subr.mxu0 0.0
  %95 = vmatpush1.msra.mxu0 %v23
  %96 = vmatprep.subr.mxu0 0.0
  %97 = vmatpush1.msra.mxu0 %v22
  %98 = vmatprep.subr.mxu0 0.0
  %99 = vmatpush1.msra.mxu0 %v21
  %100 = vmatprep.subr.mxu0 0.0
  %101 = vmatpush1.msra.mxu0 %v20
  %102 = vmatprep.subr.mxu0 0.0
  %103 = vmatpush2.msra.mxu0 0.0
  %104 = vmatprep.subr.mxu0 0.0
  %105 = vmatpush2.msra.mxu0 0.0
  %106 = vmatprep.subr.mxu0 0.0
  %107 = vmatpush2.msra.mxu0 0.0
  %108 = vmatprep.subr.mxu0 0.0
  %109 = vmatpush2.msra.mxu0 0.0
  %110 = vmatprep.subr.mxu0 0.0
  %111 = vmatpush2.msra.mxu0 0.0
  %112 = vmatprep.subr.mxu0 0.0
  %113 = vmatpush2.msra.mxu0 0.0
  %114 = vmatprep.subr.mxu0 0.0
  %115 = vmatpush2.msra.mxu0 0.0
  %116 = vmatprep.subr.mxu0 0.0
  %117 = vmatpush2.msra.mxu0 0.0
  %118 = vmatprep.subr.mxu0 0.0
  %119 = vmatpush2.msra.mxu0 0.0
  %120 = vmatprep.subr.mxu0 0.0
  %121 = vmatpush2.msra.mxu0 0.0
  %122 = vmatprep.subr.mxu0 0.0
  %123 = vmatpush2.msra.mxu0 0.0
  %124 = vmatprep.subr.mxu0 0.0
  %125 = vmatpush2.msra.mxu0 0.0
  %126 = vmatprep.subr.mxu0 0.0
  %127 = vmatpush2.msra.mxu0 0.0
  %128 = vmatprep.subr.mxu0 0.0
  %129 = vmatpush2.msra.mxu0 0.0
  %130 = vmatprep.subr.mxu0 0.0
  %131 = vmatpush2.msra.mxu0 0.0
  %132 = vmatprep.subr.mxu0 0.0
  %133 = vmatpush2.msra.mxu0 0.0
  %134 = vmatprep.mubr.f32.mxu0 0.0
  %135 = vmatmul.mubr.f32.gmra.mxu0 %v68
  %v136 = vpop.f32.mrf.mxu0
  %v137 = vadd.f32 0.0, %v136
  %v138 = vpop.f32.mrf.mxu0
  %139 = vdwg.mxu0
  %140 = vmatprep.subr.mxu0 0.0
  %141 = vmatpush1.msra.mxu0 0.0
  %142 = vmatprep.subr.mxu0 0.0
  %143 = vmatpush1.msra.mxu0 0.0
  %144 = vmatprep.subr.mxu0 0.0
  %145 = vmatpush1.msra.mxu0 0.0
  %146 = vmatprep.subr.mxu0 0.0
  %147 = vmatpush1.msra.mxu0 0.0
  %148 = vmatprep.subr.mxu0 0.0
  %149 = vmatpush1.msra.mxu0 %v44
  %150 = vmatprep.subr.mxu0 0.0
  %151 = vmatpush1.msra.mxu0 %v43
  %152 = vmatprep.subr.mxu0 0.0
  %153 = vmatpush1.msra.mxu0 %v42
  %154 = vmatprep.subr.mxu0 0.0
  %155 = vmatpush1.msra.mxu0 %v41
  %156 = vmatprep.subr.mxu0 0.0
  %157 = vmatpush1.msra.mxu0 %v40
  %158 = vmatprep.subr.mxu0 0.0
  %159 = vmatpush1.msra.mxu0 %v39
  %160 = vmatprep.subr.mxu0 0.0
  %161 = vmatpush1.msra.mxu0 %v38
  %162 = vmatprep.subr.mxu0 0.0
  %163 = vmatpush1.msra.mxu0 %v37
  %164 = vmatprep.subr.mxu0 0.0
  %165 = vmatpush1.msra.mxu0 %v36
  %166 = vmatprep.subr.mxu0 0.0
  %167 = vmatpush1.msra.mxu0 %v35
  %168 = vmatprep.subr.mxu0 0.0
  %169 = vmatpush1.msra.mxu0 %v34
  %170 = vmatprep.subr.mxu0 0.0
  %171 = vmatpush1.msra.mxu0 %v33
  %172 = vmatprep.subr.mxu0 0.0
  %173 = vmatpush2.msra.mxu0 0.0
  %174 = vmatprep.subr.mxu0 0.0
  %175 = vmatpush2.msra.mxu0 0.0
  %176 = vmatprep.subr.mxu0 0.0
  %177 = vmatpush2.msra.mxu0 0.0
  %178 = vmatprep.subr.mxu0 0.0
  %179 = vmatpush2.msra.mxu0 0.0
  %180 = vmatprep.subr.mxu0 0.0
  %181 = vmatpush2.msra.mxu0 0.0
  %182 = vmatprep.subr.mxu0 0.0
  %183 = vmatpush2.msra.mxu0 0.0
  %184 = vmatprep.subr.mxu0 0.0
  %185 = vmatpush2.msra.mxu0 0.0
  %186 = vmatprep.subr.mxu0 0.0
  %187 = vmatpush2.msra.mxu0 0.0
  %188 = vmatprep.subr.mxu0 0.0
  %189 = vmatpush2.msra.mxu0 0.0
  %190 = vmatprep.subr.mxu0 0.0
  %191 = vmatpush2.msra.mxu0 0.0
  %192 = vmatprep.subr.mxu0 0.0
  %193 = vmatpush2.msra.mxu0 0.0
  %194 = vmatprep.subr.mxu0 0.0
  %195 = vmatpush2.msra.mxu0 0.0
  %196 = vmatprep.subr.mxu0 0.0
  %197 = vmatpush2.msra.mxu0 0.0
  %198 = vmatprep.subr.mxu0 0.0
  %199 = vmatpush2.msra.mxu0 0.0
  %200 = vmatprep.subr.mxu0 0.0
  %201 = vmatpush2.msra.mxu0 0.0
  %202 = vmatprep.subr.mxu0 0.0
  %203 = vmatpush2.msra.mxu0 0.0
  %204 = vmatprep.mubr.f32.mxu0 0.0
  %205 = vmatmul.mubr.f32.gmra.mxu0 %v68
  %v206 = vpop.f32.mrf.mxu0
  %v207 = vadd.f32 0.0, %v206
  %v208 = vpop.f32.mrf.mxu0
  %209 = vdwg.mxu0
  %210 = vmatprep.subr.mxu0 0.0
  %211 = vmatpush1.msra.mxu0 0.0
  %212 = vmatprep.subr.mxu0 0.0
  %213 = vmatpush1.msra.mxu0 0.0
  %214 = vmatprep.subr.mxu0 0.0
  %215 = vmatpush1.msra.mxu0 0.0
  %216 = vmatprep.subr.mxu0 0.0
  %217 = vmatpush1.msra.mxu0 0.0
  %218 = vmatprep.subr.mxu0 0.0
  %219 = vmatpush1.msra.mxu0 %v57
  %220 = vmatprep.subr.mxu0 0.0
  %221 = vmatpush1.msra.mxu0 %v56
  %222 = vmatprep.subr.mxu0 0.0
  %223 = vmatpush1.msra.mxu0 %v55
  %224 = vmatprep.subr.mxu0 0.0
  %225 = vmatpush1.msra.mxu0 %v54
  %226 = vmatprep.subr.mxu0 0.0
  %227 = vmatpush1.msra.mxu0 %v53
  %228 = vmatprep.subr.mxu0 0.0
  %229 = vmatpush1.msra.mxu0 %v52
  %230 = vmatprep.subr.mxu0 0.0
  %231 = vmatpush1.msra.mxu0 %v51
  %232 = vmatprep.subr.mxu0 0.0
  %233 = vmatpush1.msra.mxu0 %v50
  %234 = vmatprep.subr.mxu0 0.0
  %235 = vmatpush1.msra.mxu0 %v49
  %236 = vmatprep.subr.mxu0 0.0
  %237 = vmatpush1.msra.mxu0 %v48
  %238 = vmatprep.subr.mxu0 0.0
  %239 = vmatpush1.msra.mxu0 %v47
  %240 = vmatprep.subr.mxu0 0.0
  %241 = vmatpush1.msra.mxu0 %v46
  %242 = vmatprep.subr.mxu0 0.0
  %243 = vmatpush2.msra.mxu0 0.0
  %244 = vmatprep.subr.mxu0 0.0
  %245 = vmatpush2.msra.mxu0 0.0
  %246 = vmatprep.subr.mxu0 0.0
  %247 = vmatpush2.msra.mxu0 0.0
  %248 = vmatprep.subr.mxu0 0.0
  %249 = vmatpush2.msra.mxu0 0.0
  %250 = vmatprep.subr.mxu0 0.0
  %251 = vmatpush2.msra.mxu0 0.0
  %252 = vmatprep.subr.mxu0 0.0
  %253 = vmatpush2.msra.mxu0 0.0
  %254 = vmatprep.subr.mxu0 0.0
  %255 = vmatpush2.msra.mxu0 0.0
  %256 = vmatprep.subr.mxu0 0.0
  %257 = vmatpush2.msra.mxu0 0.0
  %258 = vmatprep.subr.mxu0 0.0
  %259 = vmatpush2.msra.mxu0 0.0
  %260 = vmatprep.subr.mxu0 0.0
  %261 = vmatpush2.msra.mxu0 0.0
  %262 = vmatprep.subr.mxu0 0.0
  %263 = vmatpush2.msra.mxu0 0.0
  %264 = vmatprep.subr.mxu0 0.0
  %265 = vmatpush2.msra.mxu0 0.0
  %266 = vmatprep.subr.mxu0 0.0
  %267 = vmatpush2.msra.mxu0 0.0
  %268 = vmatprep.subr.mxu0 0.0
  %269 = vmatpush2.msra.mxu0 0.0
  %270 = vmatprep.subr.mxu0 0.0
  %271 = vmatpush2.msra.mxu0 0.0
  %272 = vmatprep.subr.mxu0 0.0
  %273 = vmatpush2.msra.mxu0 0.0
  %274 = vmatprep.mubr.f32.mxu0 0.0
  %275 = vmatmul.mubr.f32.gmra.mxu0 %v68
  %v276 = vpop.f32.mrf.mxu0
  %v277 = vadd.f32 %v63, %v276
  %v278 = vpop.f32.mrf.mxu0
  %279 = vdwg.mxu0
  %v280 = vld [vmem:[%s0] sm:$0x3]
  %v281 = vadd.f32 %v280, %v137
  %v282 = vxor.u32 %v281, 2147483648
  %v283 = vmul.f32 %v282, 1.442695
  %v284 = vpow.pop %v283
  %v285 = vadd.f32 %v284, 1.0
  %v286 = vrcp.pop %v285
  %v287 = vmul.f32 1.0, %v286
  %s288 = scalar_lea.vmem %s0, 16
  %v289 = vld [vmem:[%s288] sm:$0x3]
  %v290 = vadd.f32 %v289, %v207
  %v291 = vxor.u32 %v290, 2147483648
  %v292 = vmul.f32 %v291, 1.442695
  %v293 = vpow.pop %v292
  %v294 = vadd.f32 %v293, 1.0
  %v295 = vrcp.pop %v294
  %v296 = vmul.f32 1.0, %v295
  %s297 = scalar_lea.vmem %s0, 32
  %v298 = vld [vmem:[%s297] sm:$0x3]
  %v299 = vmul.f32 %v287, %v277
  %v300 = vadd.f32 %v298, %v299
  %v301 = vtanh.pop %v300
  %v302 = vsub.f32 1.0, %v296
  %v303 = vmul.f32 %v302, %v301
  %v304 = vmul.f32 %v296, %v65
  %v305 = vadd.f32 %v303, %v304
  %vm306 = vcmask 779264
  %307 = vst.msk [vmem:[#allocation2] sm:$0x3] %vm306, %v305
  %308 = vst.msk [vmem:[%s3] sm:$0x3] %vm306, %v305
  %v309 = vld [vmem:[#allocation2] sm:$0x3]
  %v311 = vsel %vm66, %v309, 0
  %313 = vmatprep.subr.mxu0 0.0
  %314 = vmatpush1.msra.mxu0 0.0
  %315 = vmatprep.subr.mxu0 0.0
  %316 = vmatpush1.msra.mxu0 0.0
  %317 = vmatprep.subr.mxu0 0.0
  %318 = vmatpush1.msra.mxu0 0.0
  %319 = vmatprep.subr.mxu0 0.0
  %320 = vmatpush1.msra.mxu0 0.0
  %321 = vmatprep.subr.mxu0 0.0
  %322 = vmatpush1.msra.mxu0 %v31
  %323 = vmatprep.subr.mxu0 0.0
  %324 = vmatpush1.msra.mxu0 %v30
  %325 = vmatprep.subr.mxu0 0.0
  %326 = vmatpush1.msra.mxu0 %v29
  %327 = vmatprep.subr.mxu0 0.0
  %328 = vmatpush1.msra.mxu0 %v28
  %329 = vmatprep.subr.mxu0 0.0
  %330 = vmatpush1.msra.mxu0 %v27
  %331 = vmatprep.subr.mxu0 0.0
  %332 = vmatpush1.msra.mxu0 %v26
  %333 = vmatprep.subr.mxu0 0.0
  %334 = vmatpush1.msra.mxu0 %v25
  %335 = vmatprep.subr.mxu0 0.0
  %336 = vmatpush1.msra.mxu0 %v24
  %337 = vmatprep.subr.mxu0 0.0
  %338 = vmatpush1.msra.mxu0 %v23
  %339 = vmatprep.subr.mxu0 0.0
  %340 = vmatpush1.msra.mxu0 %v22
  %341 = vmatprep.subr.mxu0 0.0
  %342 = vmatpush1.msra.mxu0 %v21
  %343 = vmatprep.subr.mxu0 0.0
  %344 = vmatpush1.msra.mxu0 %v20
  %345 = vmatprep.subr.mxu0 0.0
  %346 = vmatpush2.msra.mxu0 0.0
  %347 = vmatprep.subr.mxu0 0.0
  %348 = vmatpush2.msra.mxu0 0.0
  %349 = vmatprep.subr.mxu0 0.0
  %350 = vmatpush2.msra.mxu0 0.0
  %351 = vmatprep.subr.mxu0 0.0
  %352 = vmatpush2.msra.mxu0 0.0
  %353 = vmatprep.subr.mxu0 0.0
  %354 = vmatpush2.msra.mxu0 0.0
  %355 = vmatprep.subr.mxu0 0.0
  %356 = vmatpush2.msra.mxu0 0.0
  %357 = vmatprep.subr.mxu0 0.0
  %358 = vmatpush2.msra.mxu0 0.0
  %359 = vmatprep.subr.mxu0 0.0
  %360 = vmatpush2.msra.mxu0 0.0
  %361 = vmatprep.subr.mxu0 0.0
  %362 = vmatpush2.msra.mxu0 0.0
  %363 = vmatprep.subr.mxu0 0.0
  %364 = vmatpush2.msra.mxu0 0.0
  %365 = vmatprep.subr.mxu0 0.0
  %366 = vmatpush2.msra.mxu0 0.0
  %367 = vmatprep.subr.mxu0 0.0
  %368 = vmatpush2.msra.mxu0 0.0
  %369 = vmatprep.subr.mxu0 0.0
  %370 = vmatpush2.msra.mxu0 0.0
  %371 = vmatprep.subr.mxu0 0.0
  %372 = vmatpush2.msra.mxu0 0.0
  %373 = vmatprep.subr.mxu0 0.0
  %374 = vmatpush2.msra.mxu0 0.0
  %375 = vmatprep.subr.mxu0 0.0
  %376 = vmatpush2.msra.mxu0 0.0
  %377 = vmatprep.mubr.f32.mxu0 0.0
  %378 = vmatmul.mubr.f32.gmra.mxu0 %v311
  %v379 = vpop.f32.mrf.mxu0
  %v380 = vadd.f32 0.0, %v379
  %v381 = vpop.f32.mrf.mxu0
  %382 = vdwg.mxu0
  %383 = vmatprep.subr.mxu0 0.0
  %384 = vmatpush1.msra.mxu0 0.0
  %385 = vmatprep.subr.mxu0 0.0
  %386 = vmatpush1.msra.mxu0 0.0
  %387 = vmatprep.subr.mxu0 0.0
  %388 = vmatpush1.msra.mxu0 0.0
  %389 = vmatprep.subr.mxu0 0.0
  %390 = vmatpush1.msra.mxu0 0.0
  %391 = vmatprep.subr.mxu0 0.0
  %392 = vmatpush1.msra.mxu0 %v44
  %393 = vmatprep.subr.mxu0 0.0
  %394 = vmatpush1.msra.mxu0 %v43
  %395 = vmatprep.subr.mxu0 0.0
  %396 = vmatpush1.msra.mxu0 %v42
  %397 = vmatprep.subr.mxu0 0.0
  %398 = vmatpush1.msra.mxu0 %v41
  %399 = vmatprep.subr.mxu0 0.0
  %400 = vmatpush1.msra.mxu0 %v40
  %401 = vmatprep.subr.mxu0 0.0
  %402 = vmatpush1.msra.mxu0 %v39
  %403 = vmatprep.subr.mxu0 0.0
  %404 = vmatpush1.msra.mxu0 %v38
  %405 = vmatprep.subr.mxu0 0.0
  %406 = vmatpush1.msra.mxu0 %v37
  %407 = vmatprep.subr.mxu0 0.0
  %408 = vmatpush1.msra.mxu0 %v36
  %409 = vmatprep.subr.mxu0 0.0
  %410 = vmatpush1.msra.mxu0 %v35
  %411 = vmatprep.subr.mxu0 0.0
  %412 = vmatpush1.msra.mxu0 %v34
  %413 = vmatprep.subr.mxu0 0.0
  %414 = vmatpush1.msra.mxu0 %v33
  %415 = vmatprep.subr.mxu0 0.0
  %416 = vmatpush2.msra.mxu0 0.0
  %417 = vmatprep.subr.mxu0 0.0
  %418 = vmatpush2.msra.mxu0 0.0
  %419 = vmatprep.subr.mxu0 0.0
  %420 = vmatpush2.msra.mxu0 0.0
  %421 = vmatprep.subr.mxu0 0.0
  %422 = vmatpush2.msra.mxu0 0.0
  %423 = vmatprep.subr.mxu0 0.0
  %424 = vmatpush2.msra.mxu0 0.0
  %425 = vmatprep.subr.mxu0 0.0
  %426 = vmatpush2.msra.mxu0 0.0
  %427 = vmatprep.subr.mxu0 0.0
  %428 = vmatpush2.msra.mxu0 0.0
  %429 = vmatprep.subr.mxu0 0.0
  %430 = vmatpush2.msra.mxu0 0.0
  %431 = vmatprep.subr.mxu0 0.0
  %432 = vmatpush2.msra.mxu0 0.0
  %433 = vmatprep.subr.mxu0 0.0
  %434 = vmatpush2.msra.mxu0 0.0
  %435 = vmatprep.subr.mxu0 0.0
  %436 = vmatpush2.msra.mxu0 0.0
  %437 = vmatprep.subr.mxu0 0.0
  %438 = vmatpush2.msra.mxu0 0.0
  %439 = vmatprep.subr.mxu0 0.0
  %440 = vmatpush2.msra.mxu0 0.0
  %441 = vmatprep.subr.mxu0 0.0
  %442 = vmatpush2.msra.mxu0 0.0
  %443 = vmatprep.subr.mxu0 0.0
  %444 = vmatpush2.msra.mxu0 0.0
  %445 = vmatprep.subr.mxu0 0.0
  %446 = vmatpush2.msra.mxu0 0.0
  %447 = vmatprep.mubr.f32.mxu0 0.0
  %448 = vmatmul.mubr.f32.gmra.mxu0 %v311
  %v449 = vpop.f32.mrf.mxu0
  %v450 = vadd.f32 0.0, %v449
  %v451 = vpop.f32.mrf.mxu0
  %452 = vdwg.mxu0
  %453 = vmatprep.subr.mxu0 0.0
  %454 = vmatpush1.msra.mxu0 0.0
  %455 = vmatprep.subr.mxu0 0.0
  %456 = vmatpush1.msra.mxu0 0.0
  %457 = vmatprep.subr.mxu0 0.0
  %458 = vmatpush1.msra.mxu0 0.0
  %459 = vmatprep.subr.mxu0 0.0
  %460 = vmatpush1.msra.mxu0 0.0
  %461 = vmatprep.subr.mxu0 0.0
  %462 = vmatpush1.msra.mxu0 %v57
  %463 = vmatprep.subr.mxu0 0.0
  %464 = vmatpush1.msra.mxu0 %v56
  %465 = vmatprep.subr.mxu0 0.0
  %466 = vmatpush1.msra.mxu0 %v55
  %467 = vmatprep.subr.mxu0 0.0
  %468 = vmatpush1.msra.mxu0 %v54
  %469 = vmatprep.subr.mxu0 0.0
  %470 = vmatpush1.msra.mxu0 %v53
  %471 = vmatprep.subr.mxu0 0.0
  %472 = vmatpush1.msra.mxu0 %v52
  %473 = vmatprep.subr.mxu0 0.0
  %474 = vmatpush1.msra.mxu0 %v51
  %475 = vmatprep.subr.mxu0 0.0
  %476 = vmatpush1.msra.mxu0 %v50
  %477 = vmatprep.subr.mxu0 0.0
  %478 = vmatpush1.msra.mxu0 %v49
  %479 = vmatprep.subr.mxu0 0.0
  %480 = vmatpush1.msra.mxu0 %v48
  %481 = vmatprep.subr.mxu0 0.0
  %482 = vmatpush1.msra.mxu0 %v47
  %483 = vmatprep.subr.mxu0 0.0
  %484 = vmatpush1.msra.mxu0 %v46
  %485 = vmatprep.subr.mxu0 0.0
  %486 = vmatpush2.msra.mxu0 0.0
  %487 = vmatprep.subr.mxu0 0.0
  %488 = vmatpush2.msra.mxu0 0.0
  %489 = vmatprep.subr.mxu0 0.0
  %490 = vmatpush2.msra.mxu0 0.0
  %491 = vmatprep.subr.mxu0 0.0
  %492 = vmatpush2.msra.mxu0 0.0
  %493 = vmatprep.subr.mxu0 0.0
  %494 = vmatpush2.msra.mxu0 0.0
  %495 = vmatprep.subr.mxu0 0.0
  %496 = vmatpush2.msra.mxu0 0.0
  %497 = vmatprep.subr.mxu0 0.0
  %498 = vmatpush2.msra.mxu0 0.0
  %499 = vmatprep.subr.mxu0 0.0
  %500 = vmatpush2.msra.mxu0 0.0
  %501 = vmatprep.subr.mxu0 0.0
  %502 = vmatpush2.msra.mxu0 0.0
  %503 = vmatprep.subr.mxu0 0.0
  %504 = vmatpush2.msra.mxu0 0.0
  %505 = vmatprep.subr.mxu0 0.0
  %506 = vmatpush2.msra.mxu0 0.0
  %507 = vmatprep.subr.mxu0 0.0
  %508 = vmatpush2.msra.mxu0 0.0
  %509 = vmatprep.subr.mxu0 0.0
  %510 = vmatpush2.msra.mxu0 0.0
  %511 = vmatprep.subr.mxu0 0.0
  %512 = vmatpush2.msra.mxu0 0.0
  %513 = vmatprep.subr.mxu0 0.0
  %514 = vmatpush2.msra.mxu0 0.0
  %515 = vmatprep.subr.mxu0 0.0
  %516 = vmatpush2.msra.mxu0 0.0
  %517 = vmatprep.mubr.f32.mxu0 0.0
  %518 = vmatmul.mubr.f32.gmra.mxu0 %v311
  %v519 = vpop.f32.mrf.mxu0
  %v520 = vadd.f32 %v63, %v519
  %v521 = vpop.f32.mrf.mxu0
  %522 = vdwg.mxu0
  %s523 = scalar_lea.vmem %s0, 2
  %v524 = vld [vmem:[%s523] sm:$0x3]
  %v525 = vadd.f32 %v524, %v380
  %v526 = vxor.u32 %v525, 2147483648
  %v527 = vmul.f32 %v526, 1.442695
  %v528 = vpow.pop %v527
  %v529 = vadd.f32 %v528, 1.0
  %v530 = vrcp.pop %v529
  %v531 = vmul.f32 1.0, %v530
  %s532 = scalar_lea.vmem %s0, 18
  %v533 = vld [vmem:[%s532] sm:$0x3]
  %v534 = vadd.f32 %v533, %v450
  %v535 = vxor.u32 %v534, 2147483648
  %v536 = vmul.f32 %v535, 1.442695
  %v537 = vpow.pop %v536
  %v538 = vadd.f32 %v537, 1.0
  %v539 = vrcp.pop %v538
  %v540 = vmul.f32 1.0, %v539
  %s541 = scalar_lea.vmem %s0, 34
  %v542 = vld [vmem:[%s541] sm:$0x3]
  %v543 = vmul.f32 %v531, %v520
  %v544 = vadd.f32 %v542, %v543
  %v545 = vtanh.pop %v544
  %v546 = vsub.f32 1.0, %v540
  %v547 = vmul.f32 %v546, %v545
  %v548 = vmul.f32 %v540, %v309
  %v549 = vadd.f32 %v547, %v548
  %550 = vst.msk [vmem:[#allocation2] sm:$0x3] %vm306, %v549
  %s551 = scalar_lea.vmem %s3, 2
  %552 = vst.msk [vmem:[%s551] sm:$0x3] %vm306, %v549
  %v553 = vld [vmem:[#allocation2] sm:$0x3]
  %v555 = vsel %vm66, %v553, 0
  %557 = vmatprep.subr.mxu0 0.0
  %558 = vmatpush1.msra.mxu0 0.0
  %559 = vmatprep.subr.mxu0 0.0
  %560 = vmatpush1.msra.mxu0 0.0
  %561 = vmatprep.subr.mxu0 0.0
  %562 = vmatpush1.msra.mxu0 0.0
  %563 = vmatprep.subr.mxu0 0.0
  %564 = vmatpush1.msra.mxu0 0.0
  %565 = vmatprep.subr.mxu0 0.0
  %566 = vmatpush1.msra.mxu0 %v31
  %567 = vmatprep.subr.mxu0 0.0
  %568 = vmatpush1.msra.mxu0 %v30
  %569 = vmatprep.subr.mxu0 0.0
  %570 = vmatpush1.msra.mxu0 %v29
  %571 = vmatprep.subr.mxu0 0.0
  %572 = vmatpush1.msra.mxu0 %v28
  %573 = vmatprep.subr.mxu0 0.0
  %574 = vmatpush1.msra.mxu0 %v27
  %575 = vmatprep.subr.mxu0 0.0
  %576 = vmatpush1.msra.mxu0 %v26
  %577 = vmatprep.subr.mxu0 0.0
  %578 = vmatpush1.msra.mxu0 %v25
  %579 = vmatprep.subr.mxu0 0.0
  %580 = vmatpush1.msra.mxu0 %v24
  %581 = vmatprep.subr.mxu0 0.0
  %582 = vmatpush1.msra.mxu0 %v23
  %583 = vmatprep.subr.mxu0 0.0
  %584 = vmatpush1.msra.mxu0 %v22
  %585 = vmatprep.subr.mxu0 0.0
  %586 = vmatpush1.msra.mxu0 %v21
  %587 = vmatprep.subr.mxu0 0.0
  %588 = vmatpush1.msra.mxu0 %v20
  %589 = vmatprep.subr.mxu0 0.0
  %590 = vmatpush2.msra.mxu0 0.0
  %591 = vmatprep.subr.mxu0 0.0
  %592 = vmatpush2.msra.mxu0 0.0
  %593 = vmatprep.subr.mxu0 0.0
  %594 = vmatpush2.msra.mxu0 0.0
  %595 = vmatprep.subr.mxu0 0.0
  %596 = vmatpush2.msra.mxu0 0.0
  %597 = vmatprep.subr.mxu0 0.0
  %598 = vmatpush2.msra.mxu0 0.0
  %599 = vmatprep.subr.mxu0 0.0
  %600 = vmatpush2.msra.mxu0 0.0
  %601 = vmatprep.subr.mxu0 0.0
  %602 = vmatpush2.msra.mxu0 0.0
  %603 = vmatprep.subr.mxu0 0.0
  %604 = vmatpush2.msra.mxu0 0.0
  %605 = vmatprep.subr.mxu0 0.0
  %606 = vmatpush2.msra.mxu0 0.0
  %607 = vmatprep.subr.mxu0 0.0
  %608 = vmatpush2.msra.mxu0 0.0
  %609 = vmatprep.subr.mxu0 0.0
  %610 = vmatpush2.msra.mxu0 0.0
  %611 = vmatprep.subr.mxu0 0.0
  %612 = vmatpush2.msra.mxu0 0.0
  %613 = vmatprep.subr.mxu0 0.0
  %614 = vmatpush2.msra.mxu0 0.0
  %615 = vmatprep.subr.mxu0 0.0
  %616 = vmatpush2.msra.mxu0 0.0
  %617 = vmatprep.subr.mxu0 0.0
  %618 = vmatpush2.msra.mxu0 0.0
  %619 = vmatprep.subr.mxu0 0.0
  %620 = vmatpush2.msra.mxu0 0.0
  %621 = vmatprep.mubr.f32.mxu0 0.0
  %622 = vmatmul.mubr.f32.gmra.mxu0 %v555
  %v623 = vpop.f32.mrf.mxu0
  %v624 = vadd.f32 0.0, %v623
  %v625 = vpop.f32.mrf.mxu0
  %626 = vdwg.mxu0
  %627 = vmatprep.subr.mxu0 0.0
  %628 = vmatpush1.msra.mxu0 0.0
  %629 = vmatprep.subr.mxu0 0.0
  %630 = vmatpush1.msra.mxu0 0.0
  %631 = vmatprep.subr.mxu0 0.0
  %632 = vmatpush1.msra.mxu0 0.0
  %633 = vmatprep.subr.mxu0 0.0
  %634 = vmatpush1.msra.mxu0 0.0
  %635 = vmatprep.subr.mxu0 0.0
  %636 = vmatpush1.msra.mxu0 %v44
  %637 = vmatprep.subr.mxu0 0.0
  %638 = vmatpush1.msra.mxu0 %v43
  %639 = vmatprep.subr.mxu0 0.0
  %640 = vmatpush1.msra.mxu0 %v42
  %641 = vmatprep.subr.mxu0 0.0
  %642 = vmatpush1.msra.mxu0 %v41
  %643 = vmatprep.subr.mxu0 0.0
  %644 = vmatpush1.msra.mxu0 %v40
  %645 = vmatprep.subr.mxu0 0.0
  %646 = vmatpush1.msra.mxu0 %v39
  %647 = vmatprep.subr.mxu0 0.0
  %648 = vmatpush1.msra.mxu0 %v38
  %649 = vmatprep.subr.mxu0 0.0
  %650 = vmatpush1.msra.mxu0 %v37
  %651 = vmatprep.subr.mxu0 0.0
  %652 = vmatpush1.msra.mxu0 %v36
  %653 = vmatprep.subr.mxu0 0.0
  %654 = vmatpush1.msra.mxu0 %v35
  %655 = vmatprep.subr.mxu0 0.0
  %656 = vmatpush1.msra.mxu0 %v34
  %657 = vmatprep.subr.mxu0 0.0
  %658 = vmatpush1.msra.mxu0 %v33
  %659 = vmatprep.subr.mxu0 0.0
  %660 = vmatpush2.msra.mxu0 0.0
  %661 = vmatprep.subr.mxu0 0.0
  %662 = vmatpush2.msra.mxu0 0.0
  %663 = vmatprep.subr.mxu0 0.0
  %664 = vmatpush2.msra.mxu0 0.0
  %665 = vmatprep.subr.mxu0 0.0
  %666 = vmatpush2.msra.mxu0 0.0
  %667 = vmatprep.subr.mxu0 0.0
  %668 = vmatpush2.msra.mxu0 0.0
  %669 = vmatprep.subr.mxu0 0.0
  %670 = vmatpush2.msra.mxu0 0.0
  %671 = vmatprep.subr.mxu0 0.0
  %672 = vmatpush2.msra.mxu0 0.0
  %673 = vmatprep.subr.mxu0 0.0
  %674 = vmatpush2.msra.mxu0 0.0
  %675 = vmatprep.subr.mxu0 0.0
  %676 = vmatpush2.msra.mxu0 0.0
  %677 = vmatprep.subr.mxu0 0.0
  %678 = vmatpush2.msra.mxu0 0.0
  %679 = vmatprep.subr.mxu0 0.0
  %680 = vmatpush2.msra.mxu0 0.0
  %681 = vmatprep.subr.mxu0 0.0
  %682 = vmatpush2.msra.mxu0 0.0
  %683 = vmatprep.subr.mxu0 0.0
  %684 = vmatpush2.msra.mxu0 0.0
  %685 = vmatprep.subr.mxu0 0.0
  %686 = vmatpush2.msra.mxu0 0.0
  %687 = vmatprep.subr.mxu0 0.0
  %688 = vmatpush2.msra.mxu0 0.0
  %689 = vmatprep.subr.mxu0 0.0
  %690 = vmatpush2.msra.mxu0 0.0
  %691 = vmatprep.mubr.f32.mxu0 0.0
  %692 = vmatmul.mubr.f32.gmra.mxu0 %v555
  %v693 = vpop.f32.mrf.mxu0
  %v694 = vadd.f32 0.0, %v693
  %v695 = vpop.f32.mrf.mxu0
  %696 = vdwg.mxu0
  %697 = vmatprep.subr.mxu0 0.0
  %698 = vmatpush1.msra.mxu0 0.0
  %699 = vmatprep.subr.mxu0 0.0
  %700 = vmatpush1.msra.mxu0 0.0
  %701 = vmatprep.subr.mxu0 0.0
  %702 = vmatpush1.msra.mxu0 0.0
  %703 = vmatprep.subr.mxu0 0.0
  %704 = vmatpush1.msra.mxu0 0.0
  %705 = vmatprep.subr.mxu0 0.0
  %706 = vmatpush1.msra.mxu0 %v57
  %707 = vmatprep.subr.mxu0 0.0
  %708 = vmatpush1.msra.mxu0 %v56
  %709 = vmatprep.subr.mxu0 0.0
  %710 = vmatpush1.msra.mxu0 %v55
  %711 = vmatprep.subr.mxu0 0.0
  %712 = vmatpush1.msra.mxu0 %v54
  %713 = vmatprep.subr.mxu0 0.0
  %714 = vmatpush1.msra.mxu0 %v53
  %715 = vmatprep.subr.mxu0 0.0
  %716 = vmatpush1.msra.mxu0 %v52
  %717 = vmatprep.subr.mxu0 0.0
  %718 = vmatpush1.msra.mxu0 %v51
  %719 = vmatprep.subr.mxu0 0.0
  %720 = vmatpush1.msra.mxu0 %v50
  %721 = vmatprep.subr.mxu0 0.0
  %722 = vmatpush1.msra.mxu0 %v49
  %723 = vmatprep.subr.mxu0 0.0
  %724 = vmatpush1.msra.mxu0 %v48
  %725 = vmatprep.subr.mxu0 0.0
  %726 = vmatpush1.msra.mxu0 %v47
  %727 = vmatprep.subr.mxu0 0.0
  %728 = vmatpush1.msra.mxu0 %v46
  %729 = vmatprep.subr.mxu0 0.0
  %730 = vmatpush2.msra.mxu0 0.0
  %731 = vmatprep.subr.mxu0 0.0
  %732 = vmatpush2.msra.mxu0 0.0
  %733 = vmatprep.subr.mxu0 0.0
  %734 = vmatpush2.msra.mxu0 0.0
  %735 = vmatprep.subr.mxu0 0.0
  %736 = vmatpush2.msra.mxu0 0.0
  %737 = vmatprep.subr.mxu0 0.0
  %738 = vmatpush2.msra.mxu0 0.0
  %739 = vmatprep.subr.mxu0 0.0
  %740 = vmatpush2.msra.mxu0 0.0
  %741 = vmatprep.subr.mxu0 0.0
  %742 = vmatpush2.msra.mxu0 0.0
  %743 = vmatprep.subr.mxu0 0.0
  %744 = vmatpush2.msra.mxu0 0.0
  %745 = vmatprep.subr.mxu0 0.0
  %746 = vmatpush2.msra.mxu0 0.0
  %747 = vmatprep.subr.mxu0 0.0
  %748 = vmatpush2.msra.mxu0 0.0
  %749 = vmatprep.subr.mxu0 0.0
  %750 = vmatpush2.msra.mxu0 0.0
  %751 = vmatprep.subr.mxu0 0.0
  %752 = vmatpush2.msra.mxu0 0.0
  %753 = vmatprep.subr.mxu0 0.0
  %754 = vmatpush2.msra.mxu0 0.0
  %755 = vmatprep.subr.mxu0 0.0
  %756 = vmatpush2.msra.mxu0 0.0
  %757 = vmatprep.subr.mxu0 0.0
  %758 = vmatpush2.msra.mxu0 0.0
  %759 = vmatprep.subr.mxu0 0.0
  %760 = vmatpush2.msra.mxu0 0.0
  %761 = vmatprep.mubr.f32.mxu0 0.0
  %762 = vmatmul.mubr.f32.gmra.mxu0 %v555
  %v763 = vpop.f32.mrf.mxu0
  %v764 = vadd.f32 %v63, %v763
  %v765 = vpop.f32.mrf.mxu0
  %766 = vdwg.mxu0
  %s767 = scalar_lea.vmem %s0, 4
  %v768 = vld [vmem:[%s767] sm:$0x3]
  %v769 = vadd.f32 %v768, %v624
  %v770 = vxor.u32 %v769, 2147483648
  %v771 = vmul.f32 %v770, 1.442695
  %v772 = vpow.pop %v771
  %v773 = vadd.f32 %v772, 1.0
  %v774 = vrcp.pop %v773
  %v775 = vmul.f32 1.0, %v774
  %s776 = scalar_lea.vmem %s0, 20
  %v777 = vld [vmem:[%s776] sm:$0x3]
  %v778 = vadd.f32 %v777, %v694
  %v779 = vxor.u32 %v778, 2147483648
  %v780 = vmul.f32 %v779, 1.442695
  %v781 = vpow.pop %v780
  %v782 = vadd.f32 %v781, 1.0
  %v783 = vrcp.pop %v782
  %v784 = vmul.f32 1.0, %v783
  %s785 = scalar_lea.vmem %s0, 36
  %v786 = vld [vmem:[%s785] sm:$0x3]
  %v787 = vmul.f32 %v775, %v764
  %v788 = vadd.f32 %v786, %v787
  %v789 = vtanh.pop %v788
  %v790 = vsub.f32 1.0, %v784
  %v791 = vmul.f32 %v790, %v789
  %v792 = vmul.f32 %v784, %v553
  %v793 = vadd.f32 %v791, %v792
  %794 = vst.msk [vmem:[#allocation2] sm:$0x3] %vm306, %v793
  %s795 = scalar_lea.vmem %s3, 4
  %796 = vst.msk [vmem:[%s795] sm:$0x3] %vm306, %v793
  %v797 = vld [vmem:[#allocation2] sm:$0x3]
  %v799 = vsel %vm66, %v797, 0
  %801 = vmatprep.subr.mxu0 0.0
  %802 = vmatpush1.msra.mxu0 0.0
  %803 = vmatprep.subr.mxu0 0.0
  %804 = vmatpush1.msra.mxu0 0.0
  %805 = vmatprep.subr.mxu0 0.0
  %806 = vmatpush1.msra.mxu0 0.0
  %807 = vmatprep.subr.mxu0 0.0
  %808 = vmatpush1.msra.mxu0 0.0
  %809 = vmatprep.subr.mxu0 0.0
  %810 = vmatpush1.msra.mxu0 %v31
  %811 = vmatprep.subr.mxu0 0.0
  %812 = vmatpush1.msra.mxu0 %v30
  %813 = vmatprep.subr.mxu0 0.0
  %814 = vmatpush1.msra.mxu0 %v29
  %815 = vmatprep.subr.mxu0 0.0
  %816 = vmatpush1.msra.mxu0 %v28
  %817 = vmatprep.subr.mxu0 0.0
  %818 = vmatpush1.msra.mxu0 %v27
  %819 = vmatprep.subr.mxu0 0.0
  %820 = vmatpush1.msra.mxu0 %v26
  %821 = vmatprep.subr.mxu0 0.0
  %822 = vmatpush1.msra.mxu0 %v25
  %823 = vmatprep.subr.mxu0 0.0
  %824 = vmatpush1.msra.mxu0 %v24
  %825 = vmatprep.subr.mxu0 0.0
  %826 = vmatpush1.msra.mxu0 %v23
  %827 = vmatprep.subr.mxu0 0.0
  %828 = vmatpush1.msra.mxu0 %v22
  %829 = vmatprep.subr.mxu0 0.0
  %830 = vmatpush1.msra.mxu0 %v21
  %831 = vmatprep.subr.mxu0 0.0
  %832 = vmatpush1.msra.mxu0 %v20
  %833 = vmatprep.subr.mxu0 0.0
  %834 = vmatpush2.msra.mxu0 0.0
  %835 = vmatprep.subr.mxu0 0.0
  %836 = vmatpush2.msra.mxu0 0.0
  %837 = vmatprep.subr.mxu0 0.0
  %838 = vmatpush2.msra.mxu0 0.0
  %839 = vmatprep.subr.mxu0 0.0
  %840 = vmatpush2.msra.mxu0 0.0
  %841 = vmatprep.subr.mxu0 0.0
  %842 = vmatpush2.msra.mxu0 0.0
  %843 = vmatprep.subr.mxu0 0.0
  %844 = vmatpush2.msra.mxu0 0.0
  %845 = vmatprep.subr.mxu0 0.0
  %846 = vmatpush2.msra.mxu0 0.0
  %847 = vmatprep.subr.mxu0 0.0
  %848 = vmatpush2.msra.mxu0 0.0
  %849 = vmatprep.subr.mxu0 0.0
  %850 = vmatpush2.msra.mxu0 0.0
  %851 = vmatprep.subr.mxu0 0.0
  %852 = vmatpush2.msra.mxu0 0.0
  %853 = vmatprep.subr.mxu0 0.0
  %854 = vmatpush2.msra.mxu0 0.0
  %855 = vmatprep.subr.mxu0 0.0
  %856 = vmatpush2.msra.mxu0 0.0
  %857 = vmatprep.subr.mxu0 0.0
  %858 = vmatpush2.msra.mxu0 0.0
  %859 = vmatprep.subr.mxu0 0.0
  %860 = vmatpush2.msra.mxu0 0.0
  %861 = vmatprep.subr.mxu0 0.0
  %862 = vmatpush2.msra.mxu0 0.0
  %863 = vmatprep.subr.mxu0 0.0
  %864 = vmatpush2.msra.mxu0 0.0
  %865 = vmatprep.mubr.f32.mxu0 0.0
  %866 = vmatmul.mubr.f32.gmra.mxu0 %v799
  %v867 = vpop.f32.mrf.mxu0
  %v868 = vadd.f32 0.0, %v867
  %v869 = vpop.f32.mrf.mxu0
  %870 = vdwg.mxu0
  %871 = vmatprep.subr.mxu0 0.0
  %872 = vmatpush1.msra.mxu0 0.0
  %873 = vmatprep.subr.mxu0 0.0
  %874 = vmatpush1.msra.mxu0 0.0
  %875 = vmatprep.subr.mxu0 0.0
  %876 = vmatpush1.msra.mxu0 0.0
  %877 = vmatprep.subr.mxu0 0.0
  %878 = vmatpush1.msra.mxu0 0.0
  %879 = vmatprep.subr.mxu0 0.0
  %880 = vmatpush1.msra.mxu0 %v44
  %881 = vmatprep.subr.mxu0 0.0
  %882 = vmatpush1.msra.mxu0 %v43
  %883 = vmatprep.subr.mxu0 0.0
  %884 = vmatpush1.msra.mxu0 %v42
  %885 = vmatprep.subr.mxu0 0.0
  %886 = vmatpush1.msra.mxu0 %v41
  %887 = vmatprep.subr.mxu0 0.0
  %888 = vmatpush1.msra.mxu0 %v40
  %889 = vmatprep.subr.mxu0 0.0
  %890 = vmatpush1.msra.mxu0 %v39
  %891 = vmatprep.subr.mxu0 0.0
  %892 = vmatpush1.msra.mxu0 %v38
  %893 = vmatprep.subr.mxu0 0.0
  %894 = vmatpush1.msra.mxu0 %v37
  %895 = vmatprep.subr.mxu0 0.0
  %896 = vmatpush1.msra.mxu0 %v36
  %897 = vmatprep.subr.mxu0 0.0
  %898 = vmatpush1.msra.mxu0 %v35
  %899 = vmatprep.subr.mxu0 0.0
  %900 = vmatpush1.msra.mxu0 %v34
  %901 = vmatprep.subr.mxu0 0.0
  %902 = vmatpush1.msra.mxu0 %v33
  %903 = vmatprep.subr.mxu0 0.0
  %904 = vmatpush2.msra.mxu0 0.0
  %905 = vmatprep.subr.mxu0 0.0
  %906 = vmatpush2.msra.mxu0 0.0
  %907 = vmatprep.subr.mxu0 0.0
  %908 = vmatpush2.msra.mxu0 0.0
  %909 = vmatprep.subr.mxu0 0.0
  %910 = vmatpush2.msra.mxu0 0.0
  %911 = vmatprep.subr.mxu0 0.0
  %912 = vmatpush2.msra.mxu0 0.0
  %913 = vmatprep.subr.mxu0 0.0
  %914 = vmatpush2.msra.mxu0 0.0
  %915 = vmatprep.subr.mxu0 0.0
  %916 = vmatpush2.msra.mxu0 0.0
  %917 = vmatprep.subr.mxu0 0.0
  %918 = vmatpush2.msra.mxu0 0.0
  %919 = vmatprep.subr.mxu0 0.0
  %920 = vmatpush2.msra.mxu0 0.0
  %921 = vmatprep.subr.mxu0 0.0
  %922 = vmatpush2.msra.mxu0 0.0
  %923 = vmatprep.subr.mxu0 0.0
  %924 = vmatpush2.msra.mxu0 0.0
  %925 = vmatprep.subr.mxu0 0.0
  %926 = vmatpush2.msra.mxu0 0.0
  %927 = vmatprep.subr.mxu0 0.0
  %928 = vmatpush2.msra.mxu0 0.0
  %929 = vmatprep.subr.mxu0 0.0
  %930 = vmatpush2.msra.mxu0 0.0
  %931 = vmatprep.subr.mxu0 0.0
  %932 = vmatpush2.msra.mxu0 0.0
  %933 = vmatprep.subr.mxu0 0.0
  %934 = vmatpush2.msra.mxu0 0.0
  %935 = vmatprep.mubr.f32.mxu0 0.0
  %936 = vmatmul.mubr.f32.gmra.mxu0 %v799
  %v937 = vpop.f32.mrf.mxu0
  %v938 = vadd.f32 0.0, %v937
  %v939 = vpop.f32.mrf.mxu0
  %940 = vdwg.mxu0
  %941 = vmatprep.subr.mxu0 0.0
  %942 = vmatpush1.msra.mxu0 0.0
  %943 = vmatprep.subr.mxu0 0.0
  %944 = vmatpush1.msra.mxu0 0.0
  %945 = vmatprep.subr.mxu0 0.0
  %946 = vmatpush1.msra.mxu0 0.0
  %947 = vmatprep.subr.mxu0 0.0
  %948 = vmatpush1.msra.mxu0 0.0
  %949 = vmatprep.subr.mxu0 0.0
  %950 = vmatpush1.msra.mxu0 %v57
  %951 = vmatprep.subr.mxu0 0.0
  %952 = vmatpush1.msra.mxu0 %v56
  %953 = vmatprep.subr.mxu0 0.0
  %954 = vmatpush1.msra.mxu0 %v55
  %955 = vmatprep.subr.mxu0 0.0
  %956 = vmatpush1.msra.mxu0 %v54
  %957 = vmatprep.subr.mxu0 0.0
  %958 = vmatpush1.msra.mxu0 %v53
  %959 = vmatprep.subr.mxu0 0.0
  %960 = vmatpush1.msra.mxu0 %v52
  %961 = vmatprep.subr.mxu0 0.0
  %962 = vmatpush1.msra.mxu0 %v51
  %963 = vmatprep.subr.mxu0 0.0
  %964 = vmatpush1.msra.mxu0 %v50
  %965 = vmatprep.subr.mxu0 0.0
  %966 = vmatpush1.msra.mxu0 %v49
  %967 = vmatprep.subr.mxu0 0.0
  %968 = vmatpush1.msra.mxu0 %v48
  %969 = vmatprep.subr.mxu0 0.0
  %970 = vmatpush1.msra.mxu0 %v47
  %971 = vmatprep.subr.mxu0 0.0
  %972 = vmatpush1.msra.mxu0 %v46
  %973 = vmatprep.subr.mxu0 0.0
  %974 = vmatpush2.msra.mxu0 0.0
  %975 = vmatprep.subr.mxu0 0.0
  %976 = vmatpush2.msra.mxu0 0.0
  %977 = vmatprep.subr.mxu0 0.0
  %978 = vmatpush2.msra.mxu0 0.0
  %979 = vmatprep.subr.mxu0 0.0
  %980 = vmatpush2.msra.mxu0 0.0
  %981 = vmatprep.subr.mxu0 0.0
  %982 = vmatpush2.msra.mxu0 0.0
  %983 = vmatprep.subr.mxu0 0.0
  %984 = vmatpush2.msra.mxu0 0.0
  %985 = vmatprep.subr.mxu0 0.0
  %986 = vmatpush2.msra.mxu0 0.0
  %987 = vmatprep.subr.mxu0 0.0
  %988 = vmatpush2.msra.mxu0 0.0
  %989 = vmatprep.subr.mxu0 0.0
  %990 = vmatpush2.msra.mxu0 0.0
  %991 = vmatprep.subr.mxu0 0.0
  %992 = vmatpush2.msra.mxu0 0.0
  %993 = vmatprep.subr.mxu0 0.0
  %994 = vmatpush2.msra.mxu0 0.0
  %995 = vmatprep.subr.mxu0 0.0
  %996 = vmatpush2.msra.mxu0 0.0
  %997 = vmatprep.subr.mxu0 0.0
  %998 = vmatpush2.msra.mxu0 0.0
  %999 = vmatprep.subr.mxu0 0.0
  %1000 = vmatpush2.msra.mxu0 0.0
  %1001 = vmatprep.subr.mxu0 0.0
  %1002 = vmatpush2.msra.mxu0 0.0
  %1003 = vmatprep.subr.mxu0 0.0
  %1004 = vmatpush2.msra.mxu0 0.0
  %1005 = vmatprep.mubr.f32.mxu0 0.0
  %1006 = vmatmul.mubr.f32.gmra.mxu0 %v799
  %v1007 = vpop.f32.mrf.mxu0
  %v1008 = vadd.f32 %v63, %v1007
  %v1009 = vpop.f32.mrf.mxu0
  %1010 = vdwg.mxu0
  %s1011 = scalar_lea.vmem %s0, 6
  %v1012 = vld [vmem:[%s1011] sm:$0x3]
  %v1013 = vadd.f32 %v1012, %v868
  %v1014 = vxor.u32 %v1013, 2147483648
  %v1015 = vmul.f32 %v1014, 1.442695
  %v1016 = vpow.pop %v1015
  %v1017 = vadd.f32 %v1016, 1.0
  %v1018 = vrcp.pop %v1017
  %v1019 = vmul.f32 1.0, %v1018
  %s1020 = scalar_lea.vmem %s0, 22
  %v1021 = vld [vmem:[%s1020] sm:$0x3]
  %v1022 = vadd.f32 %v1021, %v938
  %v1023 = vxor.u32 %v1022, 2147483648
  %v1024 = vmul.f32 %v1023, 1.442695
  %v1025 = vpow.pop %v1024
  %v1026 = vadd.f32 %v1025, 1.0
  %v1027 = vrcp.pop %v1026
  %v1028 = vmul.f32 1.0, %v1027
  %s1029 = scalar_lea.vmem %s0, 38
  %v1030 = vld [vmem:[%s1029] sm:$0x3]
  %v1031 = vmul.f32 %v1019, %v1008
  %v1032 = vadd.f32 %v1030, %v1031
  %v1033 = vtanh.pop %v1032
  %v1034 = vsub.f32 1.0, %v1028
  %v1035 = vmul.f32 %v1034, %v1033
  %v1036 = vmul.f32 %v1028, %v797
  %v1037 = vadd.f32 %v1035, %v1036
  %1038 = vst.msk [vmem:[#allocation2] sm:$0x3] %vm306, %v1037
  %s1039 = scalar_lea.vmem %s3, 6
  %1040 = vst.msk [vmem:[%s1039] sm:$0x3] %vm306, %v1037
  %v1041 = vld [vmem:[#allocation2] sm:$0x3]
  %v1043 = vsel %vm66, %v1041, 0
  %1045 = vmatprep.subr.mxu0 0.0
  %1046 = vmatpush1.msra.mxu0 0.0
  %1047 = vmatprep.subr.mxu0 0.0
  %1048 = vmatpush1.msra.mxu0 0.0
  %1049 = vmatprep.subr.mxu0 0.0
  %1050 = vmatpush1.msra.mxu0 0.0
  %1051 = vmatprep.subr.mxu0 0.0
  %1052 = vmatpush1.msra.mxu0 0.0
  %1053 = vmatprep.subr.mxu0 0.0
  %1054 = vmatpush1.msra.mxu0 %v31
  %1055 = vmatprep.subr.mxu0 0.0
  %1056 = vmatpush1.msra.mxu0 %v30
  %1057 = vmatprep.subr.mxu0 0.0
  %1058 = vmatpush1.msra.mxu0 %v29
  %1059 = vmatprep.subr.mxu0 0.0
  %1060 = vmatpush1.msra.mxu0 %v28
  %1061 = vmatprep.subr.mxu0 0.0
  %1062 = vmatpush1.msra.mxu0 %v27
  %1063 = vmatprep.subr.mxu0 0.0
  %1064 = vmatpush1.msra.mxu0 %v26
  %1065 = vmatprep.subr.mxu0 0.0
  %1066 = vmatpush1.msra.mxu0 %v25
  %1067 = vmatprep.subr.mxu0 0.0
  %1068 = vmatpush1.msra.mxu0 %v24
  %1069 = vmatprep.subr.mxu0 0.0
  %1070 = vmatpush1.msra.mxu0 %v23
  %1071 = vmatprep.subr.mxu0 0.0
  %1072 = vmatpush1.msra.mxu0 %v22
  %1073 = vmatprep.subr.mxu0 0.0
  %1074 = vmatpush1.msra.mxu0 %v21
  %1075 = vmatprep.subr.mxu0 0.0
  %1076 = vmatpush1.msra.mxu0 %v20
  %1077 = vmatprep.subr.mxu0 0.0
  %1078 = vmatpush2.msra.mxu0 0.0
  %1079 = vmatprep.subr.mxu0 0.0
  %1080 = vmatpush2.msra.mxu0 0.0
  %1081 = vmatprep.subr.mxu0 0.0
  %1082 = vmatpush2.msra.mxu0 0.0
  %1083 = vmatprep.subr.mxu0 0.0
  %1084 = vmatpush2.msra.mxu0 0.0
  %1085 = vmatprep.subr.mxu0 0.0
  %1086 = vmatpush2.msra.mxu0 0.0
  %1087 = vmatprep.subr.mxu0 0.0
  %1088 = vmatpush2.msra.mxu0 0.0
  %1089 = vmatprep.subr.mxu0 0.0
  %1090 = vmatpush2.msra.mxu0 0.0
  %1091 = vmatprep.subr.mxu0 0.0
  %1092 = vmatpush2.msra.mxu0 0.0
  %1093 = vmatprep.subr.mxu0 0.0
  %1094 = vmatpush2.msra.mxu0 0.0
  %1095 = vmatprep.subr.mxu0 0.0
  %1096 = vmatpush2.msra.mxu0 0.0
  %1097 = vmatprep.subr.mxu0 0.0
  %1098 = vmatpush2.msra.mxu0 0.0
  %1099 = vmatprep.subr.mxu0 0.0
  %1100 = vmatpush2.msra.mxu0 0.0
  %1101 = vmatprep.subr.mxu0 0.0
  %1102 = vmatpush2.msra.mxu0 0.0
  %1103 = vmatprep.subr.mxu0 0.0
  %1104 = vmatpush2.msra.mxu0 0.0
  %1105 = vmatprep.subr.mxu0 0.0
  %1106 = vmatpush2.msra.mxu0 0.0
  %1107 = vmatprep.subr.mxu0 0.0
  %1108 = vmatpush2.msra.mxu0 0.0
  %1109 = vmatprep.mubr.f32.mxu0 0.0
  %1110 = vmatmul.mubr.f32.gmra.mxu0 %v1043
  %v1111 = vpop.f32.mrf.mxu0
  %v1112 = vadd.f32 0.0, %v1111
  %v1113 = vpop.f32.mrf.mxu0
  %1114 = vdwg.mxu0
  %1115 = vmatprep.subr.mxu0 0.0
  %1116 = vmatpush1.msra.mxu0 0.0
  %1117 = vmatprep.subr.mxu0 0.0
  %1118 = vmatpush1.msra.mxu0 0.0
  %1119 = vmatprep.subr.mxu0 0.0
  %1120 = vmatpush1.msra.mxu0 0.0
  %1121 = vmatprep.subr.mxu0 0.0
  %1122 = vmatpush1.msra.mxu0 0.0
  %1123 = vmatprep.subr.mxu0 0.0
  %1124 = vmatpush1.msra.mxu0 %v44
  %1125 = vmatprep.subr.mxu0 0.0
  %1126 = vmatpush1.msra.mxu0 %v43
  %1127 = vmatprep.subr.mxu0 0.0
  %1128 = vmatpush1.msra.mxu0 %v42
  %1129 = vmatprep.subr.mxu0 0.0
  %1130 = vmatpush1.msra.mxu0 %v41
  %1131 = vmatprep.subr.mxu0 0.0
  %1132 = vmatpush1.msra.mxu0 %v40
  %1133 = vmatprep.subr.mxu0 0.0
  %1134 = vmatpush1.msra.mxu0 %v39
  %1135 = vmatprep.subr.mxu0 0.0
  %1136 = vmatpush1.msra.mxu0 %v38
  %1137 = vmatprep.subr.mxu0 0.0
  %1138 = vmatpush1.msra.mxu0 %v37
  %1139 = vmatprep.subr.mxu0 0.0
  %1140 = vmatpush1.msra.mxu0 %v36
  %1141 = vmatprep.subr.mxu0 0.0
  %1142 = vmatpush1.msra.mxu0 %v35
  %1143 = vmatprep.subr.mxu0 0.0
  %1144 = vmatpush1.msra.mxu0 %v34
  %1145 = vmatprep.subr.mxu0 0.0
  %1146 = vmatpush1.msra.mxu0 %v33
  %1147 = vmatprep.subr.mxu0 0.0
  %1148 = vmatpush2.msra.mxu0 0.0
  %1149 = vmatprep.subr.mxu0 0.0
  %1150 = vmatpush2.msra.mxu0 0.0
  %1151 = vmatprep.subr.mxu0 0.0
  %1152 = vmatpush2.msra.mxu0 0.0
  %1153 = vmatprep.subr.mxu0 0.0
  %1154 = vmatpush2.msra.mxu0 0.0
  %1155 = vmatprep.subr.mxu0 0.0
  %1156 = vmatpush2.msra.mxu0 0.0
  %1157 = vmatprep.subr.mxu0 0.0
  %1158 = vmatpush2.msra.mxu0 0.0
  %1159 = vmatprep.subr.mxu0 0.0
  %1160 = vmatpush2.msra.mxu0 0.0
  %1161 = vmatprep.subr.mxu0 0.0
  %1162 = vmatpush2.msra.mxu0 0.0
  %1163 = vmatprep.subr.mxu0 0.0
  %1164 = vmatpush2.msra.mxu0 0.0
  %1165 = vmatprep.subr.mxu0 0.0
  %1166 = vmatpush2.msra.mxu0 0.0
  %1167 = vmatprep.subr.mxu0 0.0
  %1168 = vmatpush2.msra.mxu0 0.0
  %1169 = vmatprep.subr.mxu0 0.0
  %1170 = vmatpush2.msra.mxu0 0.0
  %1171 = vmatprep.subr.mxu0 0.0
  %1172 = vmatpush2.msra.mxu0 0.0
  %1173 = vmatprep.subr.mxu0 0.0
  %1174 = vmatpush2.msra.mxu0 0.0
  %1175 = vmatprep.subr.mxu0 0.0
  %1176 = vmatpush2.msra.mxu0 0.0
  %1177 = vmatprep.subr.mxu0 0.0
  %1178 = vmatpush2.msra.mxu0 0.0
  %1179 = vmatprep.mubr.f32.mxu0 0.0
  %1180 = vmatmul.mubr.f32.gmra.mxu0 %v1043
  %v1181 = vpop.f32.mrf.mxu0
  %v1182 = vadd.f32 0.0, %v1181
  %v1183 = vpop.f32.mrf.mxu0
  %1184 = vdwg.mxu0
  %1185 = vmatprep.subr.mxu0 0.0
  %1186 = vmatpush1.msra.mxu0 0.0
  %1187 = vmatprep.subr.mxu0 0.0
  %1188 = vmatpush1.msra.mxu0 0.0
  %1189 = vmatprep.subr.mxu0 0.0
  %1190 = vmatpush1.msra.mxu0 0.0
  %1191 = vmatprep.subr.mxu0 0.0
  %1192 = vmatpush1.msra.mxu0 0.0
  %1193 = vmatprep.subr.mxu0 0.0
  %1194 = vmatpush1.msra.mxu0 %v57
  %1195 = vmatprep.subr.mxu0 0.0
  %1196 = vmatpush1.msra.mxu0 %v56
  %1197 = vmatprep.subr.mxu0 0.0
  %1198 = vmatpush1.msra.mxu0 %v55
  %1199 = vmatprep.subr.mxu0 0.0
  %1200 = vmatpush1.msra.mxu0 %v54
  %1201 = vmatprep.subr.mxu0 0.0
  %1202 = vmatpush1.msra.mxu0 %v53
  %1203 = vmatprep.subr.mxu0 0.0
  %1204 = vmatpush1.msra.mxu0 %v52
  %1205 = vmatprep.subr.mxu0 0.0
  %1206 = vmatpush1.msra.mxu0 %v51
  %1207 = vmatprep.subr.mxu0 0.0
  %1208 = vmatpush1.msra.mxu0 %v50
  %1209 = vmatprep.subr.mxu0 0.0
  %1210 = vmatpush1.msra.mxu0 %v49
  %1211 = vmatprep.subr.mxu0 0.0
  %1212 = vmatpush1.msra.mxu0 %v48
  %1213 = vmatprep.subr.mxu0 0.0
  %1214 = vmatpush1.msra.mxu0 %v47
  %1215 = vmatprep.subr.mxu0 0.0
  %1216 = vmatpush1.msra.mxu0 %v46
  %1217 = vmatprep.subr.mxu0 0.0
  %1218 = vmatpush2.msra.mxu0 0.0
  %1219 = vmatprep.subr.mxu0 0.0
  %1220 = vmatpush2.msra.mxu0 0.0
  %1221 = vmatprep.subr.mxu0 0.0
  %1222 = vmatpush2.msra.mxu0 0.0
  %1223 = vmatprep.subr.mxu0 0.0
  %1224 = vmatpush2.msra.mxu0 0.0
  %1225 = vmatprep.subr.mxu0 0.0
  %1226 = vmatpush2.msra.mxu0 0.0
  %1227 = vmatprep.subr.mxu0 0.0
  %1228 = vmatpush2.msra.mxu0 0.0
  %1229 = vmatprep.subr.mxu0 0.0
  %1230 = vmatpush2.msra.mxu0 0.0
  %1231 = vmatprep.subr.mxu0 0.0
  %1232 = vmatpush2.msra.mxu0 0.0
  %1233 = vmatprep.subr.mxu0 0.0
  %1234 = vmatpush2.msra.mxu0 0.0
  %1235 = vmatprep.subr.mxu0 0.0
  %1236 = vmatpush2.msra.mxu0 0.0
  %1237 = vmatprep.subr.mxu0 0.0
  %1238 = vmatpush2.msra.mxu0 0.0
  %1239 = vmatprep.subr.mxu0 0.0
  %1240 = vmatpush2.msra.mxu0 0.0
  %1241 = vmatprep.subr.mxu0 0.0
  %1242 = vmatpush2.msra.mxu0 0.0
  %1243 = vmatprep.subr.mxu0 0.0
  %1244 = vmatpush2.msra.mxu0 0.0
  %1245 = vmatprep.subr.mxu0 0.0
  %1246 = vmatpush2.msra.mxu0 0.0
  %1247 = vmatprep.subr.mxu0 0.0
  %1248 = vmatpush2.msra.mxu0 0.0
  %1249 = vmatprep.mubr.f32.mxu0 0.0
  %1250 = vmatmul.mubr.f32.gmra.mxu0 %v1043
  %v1251 = vpop.f32.mrf.mxu0
  %v1252 = vadd.f32 %v63, %v1251
  %v1253 = vpop.f32.mrf.mxu0
  %1254 = vdwg.mxu0
  %s1255 = scalar_lea.vmem %s0, 8
  %v1256 = vld [vmem:[%s1255] sm:$0x3]
  %v1257 = vadd.f32 %v1256, %v1112
  %v1258 = vxor.u32 %v1257, 2147483648
  %v1259 = vmul.f32 %v1258, 1.442695
  %v1260 = vpow.pop %v1259
  %v1261 = vadd.f32 %v1260, 1.0
  %v1262 = vrcp.pop %v1261
  %v1263 = vmul.f32 1.0, %v1262
  %s1264 = scalar_lea.vmem %s0, 24
  %v1265 = vld [vmem:[%s1264] sm:$0x3]
  %v1266 = vadd.f32 %v1265, %v1182
  %v1267 = vxor.u32 %v1266, 2147483648
  %v1268 = vmul.f32 %v1267, 1.442695
  %v1269 = vpow.pop %v1268
  %v1270 = vadd.f32 %v1269, 1.0
  %v1271 = vrcp.pop %v1270
  %v1272 = vmul.f32 1.0, %v1271
  %s1273 = scalar_lea.vmem %s0, 40
  %v1274 = vld [vmem:[%s1273] sm:$0x3]
  %v1275 = vmul.f32 %v1263, %v1252
  %v1276 = vadd.f32 %v1274, %v1275
  %v1277 = vtanh.pop %v1276
  %v1278 = vsub.f32 1.0, %v1272
  %v1279 = vmul.f32 %v1278, %v1277
  %v1280 = vmul.f32 %v1272, %v1041
  %v1281 = vadd.f32 %v1279, %v1280
  %1282 = vst.msk [vmem:[#allocation2] sm:$0x3] %vm306, %v1281
  %s1283 = scalar_lea.vmem %s3, 8
  %1284 = vst.msk [vmem:[%s1283] sm:$0x3] %vm306, %v1281
  %v1285 = vld [vmem:[#allocation2] sm:$0x3]
  %v1287 = vsel %vm66, %v1285, 0
  %1289 = vmatprep.subr.mxu0 0.0
  %1290 = vmatpush1.msra.mxu0 0.0
  %1291 = vmatprep.subr.mxu0 0.0
  %1292 = vmatpush1.msra.mxu0 0.0
  %1293 = vmatprep.subr.mxu0 0.0
  %1294 = vmatpush1.msra.mxu0 0.0
  %1295 = vmatprep.subr.mxu0 0.0
  %1296 = vmatpush1.msra.mxu0 0.0
  %1297 = vmatprep.subr.mxu0 0.0
  %1298 = vmatpush1.msra.mxu0 %v31
  %1299 = vmatprep.subr.mxu0 0.0
  %1300 = vmatpush1.msra.mxu0 %v30
  %1301 = vmatprep.subr.mxu0 0.0
  %1302 = vmatpush1.msra.mxu0 %v29
  %1303 = vmatprep.subr.mxu0 0.0
  %1304 = vmatpush1.msra.mxu0 %v28
  %1305 = vmatprep.subr.mxu0 0.0
  %1306 = vmatpush1.msra.mxu0 %v27
  %1307 = vmatprep.subr.mxu0 0.0
  %1308 = vmatpush1.msra.mxu0 %v26
  %1309 = vmatprep.subr.mxu0 0.0
  %1310 = vmatpush1.msra.mxu0 %v25
  %1311 = vmatprep.subr.mxu0 0.0
  %1312 = vmatpush1.msra.mxu0 %v24
  %1313 = vmatprep.subr.mxu0 0.0
  %1314 = vmatpush1.msra.mxu0 %v23
  %1315 = vmatprep.subr.mxu0 0.0
  %1316 = vmatpush1.msra.mxu0 %v22
  %1317 = vmatprep.subr.mxu0 0.0
  %1318 = vmatpush1.msra.mxu0 %v21
  %1319 = vmatprep.subr.mxu0 0.0
  %1320 = vmatpush1.msra.mxu0 %v20
  %1321 = vmatprep.subr.mxu0 0.0
  %1322 = vmatpush2.msra.mxu0 0.0
  %1323 = vmatprep.subr.mxu0 0.0
  %1324 = vmatpush2.msra.mxu0 0.0
  %1325 = vmatprep.subr.mxu0 0.0
  %1326 = vmatpush2.msra.mxu0 0.0
  %1327 = vmatprep.subr.mxu0 0.0
  %1328 = vmatpush2.msra.mxu0 0.0
  %1329 = vmatprep.subr.mxu0 0.0
  %1330 = vmatpush2.msra.mxu0 0.0
  %1331 = vmatprep.subr.mxu0 0.0
  %1332 = vmatpush2.msra.mxu0 0.0
  %1333 = vmatprep.subr.mxu0 0.0
  %1334 = vmatpush2.msra.mxu0 0.0
  %1335 = vmatprep.subr.mxu0 0.0
  %1336 = vmatpush2.msra.mxu0 0.0
  %1337 = vmatprep.subr.mxu0 0.0
  %1338 = vmatpush2.msra.mxu0 0.0
  %1339 = vmatprep.subr.mxu0 0.0
  %1340 = vmatpush2.msra.mxu0 0.0
  %1341 = vmatprep.subr.mxu0 0.0
  %1342 = vmatpush2.msra.mxu0 0.0
  %1343 = vmatprep.subr.mxu0 0.0
  %1344 = vmatpush2.msra.mxu0 0.0
  %1345 = vmatprep.subr.mxu0 0.0
  %1346 = vmatpush2.msra.mxu0 0.0
  %1347 = vmatprep.subr.mxu0 0.0
  %1348 = vmatpush2.msra.mxu0 0.0
  %1349 = vmatprep.subr.mxu0 0.0
  %1350 = vmatpush2.msra.mxu0 0.0
  %1351 = vmatprep.subr.mxu0 0.0
  %1352 = vmatpush2.msra.mxu0 0.0
  %1353 = vmatprep.mubr.f32.mxu0 0.0
  %1354 = vmatmul.mubr.f32.gmra.mxu0 %v1287
  %v1355 = vpop.f32.mrf.mxu0
  %v1356 = vadd.f32 0.0, %v1355
  %v1357 = vpop.f32.mrf.mxu0
  %1358 = vdwg.mxu0
  %1359 = vmatprep.subr.mxu0 0.0
  %1360 = vmatpush1.msra.mxu0 0.0
  %1361 = vmatprep.subr.mxu0 0.0
  %1362 = vmatpush1.msra.mxu0 0.0
  %1363 = vmatprep.subr.mxu0 0.0
  %1364 = vmatpush1.msra.mxu0 0.0
  %1365 = vmatprep.subr.mxu0 0.0
  %1366 = vmatpush1.msra.mxu0 0.0
  %1367 = vmatprep.subr.mxu0 0.0
  %1368 = vmatpush1.msra.mxu0 %v44
  %1369 = vmatprep.subr.mxu0 0.0
  %1370 = vmatpush1.msra.mxu0 %v43
  %1371 = vmatprep.subr.mxu0 0.0
  %1372 = vmatpush1.msra.mxu0 %v42
  %1373 = vmatprep.subr.mxu0 0.0
  %1374 = vmatpush1.msra.mxu0 %v41
  %1375 = vmatprep.subr.mxu0 0.0
  %1376 = vmatpush1.msra.mxu0 %v40
  %1377 = vmatprep.subr.mxu0 0.0
  %1378 = vmatpush1.msra.mxu0 %v39
  %1379 = vmatprep.subr.mxu0 0.0
  %1380 = vmatpush1.msra.mxu0 %v38
  %1381 = vmatprep.subr.mxu0 0.0
  %1382 = vmatpush1.msra.mxu0 %v37
  %1383 = vmatprep.subr.mxu0 0.0
  %1384 = vmatpush1.msra.mxu0 %v36
  %1385 = vmatprep.subr.mxu0 0.0
  %1386 = vmatpush1.msra.mxu0 %v35
  %1387 = vmatprep.subr.mxu0 0.0
  %1388 = vmatpush1.msra.mxu0 %v34
  %1389 = vmatprep.subr.mxu0 0.0
  %1390 = vmatpush1.msra.mxu0 %v33
  %1391 = vmatprep.subr.mxu0 0.0
  %1392 = vmatpush2.msra.mxu0 0.0
  %1393 = vmatprep.subr.mxu0 0.0
  %1394 = vmatpush2.msra.mxu0 0.0
  %1395 = vmatprep.subr.mxu0 0.0
  %1396 = vmatpush2.msra.mxu0 0.0
  %1397 = vmatprep.subr.mxu0 0.0
  %1398 = vmatpush2.msra.mxu0 0.0
  %1399 = vmatprep.subr.mxu0 0.0
  %1400 = vmatpush2.msra.mxu0 0.0
  %1401 = vmatprep.subr.mxu0 0.0
  %1402 = vmatpush2.msra.mxu0 0.0
  %1403 = vmatprep.subr.mxu0 0.0
  %1404 = vmatpush2.msra.mxu0 0.0
  %1405 = vmatprep.subr.mxu0 0.0
  %1406 = vmatpush2.msra.mxu0 0.0
  %1407 = vmatprep.subr.mxu0 0.0
  %1408 = vmatpush2.msra.mxu0 0.0
  %1409 = vmatprep.subr.mxu0 0.0
  %1410 = vmatpush2.msra.mxu0 0.0
  %1411 = vmatprep.subr.mxu0 0.0
  %1412 = vmatpush2.msra.mxu0 0.0
  %1413 = vmatprep.subr.mxu0 0.0
  %1414 = vmatpush2.msra.mxu0 0.0
  %1415 = vmatprep.subr.mxu0 0.0
  %1416 = vmatpush2.msra.mxu0 0.0
  %1417 = vmatprep.subr.mxu0 0.0
  %1418 = vmatpush2.msra.mxu0 0.0
  %1419 = vmatprep.subr.mxu0 0.0
  %1420 = vmatpush2.msra.mxu0 0.0
  %1421 = vmatprep.subr.mxu0 0.0
  %1422 = vmatpush2.msra.mxu0 0.0
  %1423 = vmatprep.mubr.f32.mxu0 0.0
  %1424 = vmatmul.mubr.f32.gmra.mxu0 %v1287
  %v1425 = vpop.f32.mrf.mxu0
  %v1426 = vadd.f32 0.0, %v1425
  %v1427 = vpop.f32.mrf.mxu0
  %1428 = vdwg.mxu0
  %1429 = vmatprep.subr.mxu0 0.0
  %1430 = vmatpush1.msra.mxu0 0.0
  %1431 = vmatprep.subr.mxu0 0.0
  %1432 = vmatpush1.msra.mxu0 0.0
  %1433 = vmatprep.subr.mxu0 0.0
  %1434 = vmatpush1.msra.mxu0 0.0
  %1435 = vmatprep.subr.mxu0 0.0
  %1436 = vmatpush1.msra.mxu0 0.0
  %1437 = vmatprep.subr.mxu0 0.0
  %1438 = vmatpush1.msra.mxu0 %v57
  %1439 = vmatprep.subr.mxu0 0.0
  %1440 = vmatpush1.msra.mxu0 %v56
  %1441 = vmatprep.subr.mxu0 0.0
  %1442 = vmatpush1.msra.mxu0 %v55
  %1443 = vmatprep.subr.mxu0 0.0
  %1444 = vmatpush1.msra.mxu0 %v54
  %1445 = vmatprep.subr.mxu0 0.0
  %1446 = vmatpush1.msra.mxu0 %v53
  %1447 = vmatprep.subr.mxu0 0.0
  %1448 = vmatpush1.msra.mxu0 %v52
  %1449 = vmatprep.subr.mxu0 0.0
  %1450 = vmatpush1.msra.mxu0 %v51
  %1451 = vmatprep.subr.mxu0 0.0
  %1452 = vmatpush1.msra.mxu0 %v50
  %1453 = vmatprep.subr.mxu0 0.0
  %1454 = vmatpush1.msra.mxu0 %v49
  %1455 = vmatprep.subr.mxu0 0.0
  %1456 = vmatpush1.msra.mxu0 %v48
  %1457 = vmatprep.subr.mxu0 0.0
  %1458 = vmatpush1.msra.mxu0 %v47
  %1459 = vmatprep.subr.mxu0 0.0
  %1460 = vmatpush1.msra.mxu0 %v46
  %1461 = vmatprep.subr.mxu0 0.0
  %1462 = vmatpush2.msra.mxu0 0.0
  %1463 = vmatprep.subr.mxu0 0.0
  %1464 = vmatpush2.msra.mxu0 0.0
  %1465 = vmatprep.subr.mxu0 0.0
  %1466 = vmatpush2.msra.mxu0 0.0
  %1467 = vmatprep.subr.mxu0 0.0
  %1468 = vmatpush2.msra.mxu0 0.0
  %1469 = vmatprep.subr.mxu0 0.0
  %1470 = vmatpush2.msra.mxu0 0.0
  %1471 = vmatprep.subr.mxu0 0.0
  %1472 = vmatpush2.msra.mxu0 0.0
  %1473 = vmatprep.subr.mxu0 0.0
  %1474 = vmatpush2.msra.mxu0 0.0
  %1475 = vmatprep.subr.mxu0 0.0
  %1476 = vmatpush2.msra.mxu0 0.0
  %1477 = vmatprep.subr.mxu0 0.0
  %1478 = vmatpush2.msra.mxu0 0.0
  %1479 = vmatprep.subr.mxu0 0.0
  %1480 = vmatpush2.msra.mxu0 0.0
  %1481 = vmatprep.subr.mxu0 0.0
  %1482 = vmatpush2.msra.mxu0 0.0
  %1483 = vmatprep.subr.mxu0 0.0
  %1484 = vmatpush2.msra.mxu0 0.0
  %1485 = vmatprep.subr.mxu0 0.0
  %1486 = vmatpush2.msra.mxu0 0.0
  %1487 = vmatprep.subr.mxu0 0.0
  %1488 = vmatpush2.msra.mxu0 0.0
  %1489 = vmatprep.subr.mxu0 0.0
  %1490 = vmatpush2.msra.mxu0 0.0
  %1491 = vmatprep.subr.mxu0 0.0
  %1492 = vmatpush2.msra.mxu0 0.0
  %1493 = vmatprep.mubr.f32.mxu0 0.0
  %1494 = vmatmul.mubr.f32.gmra.mxu0 %v1287
  %v1495 = vpop.f32.mrf.mxu0
  %v1496 = vadd.f32 %v63, %v1495
  %v1497 = vpop.f32.mrf.mxu0
  %1498 = vdwg.mxu0
  %s1499 = scalar_lea.vmem %s0, 10
  %v1500 = vld [vmem:[%s1499] sm:$0x3]
  %v1501 = vadd.f32 %v1500, %v1356
  %v1502 = vxor.u32 %v1501, 2147483648
  %v1503 = vmul.f32 %v1502, 1.442695
  %v1504 = vpow.pop %v1503
  %v1505 = vadd.f32 %v1504, 1.0
  %v1506 = vrcp.pop %v1505
  %v1507 = vmul.f32 1.0, %v1506
  %s1508 = scalar_lea.vmem %s0, 26
  %v1509 = vld [vmem:[%s1508] sm:$0x3]
  %v1510 = vadd.f32 %v1509, %v1426
  %v1511 = vxor.u32 %v1510, 2147483648
  %v1512 = vmul.f32 %v1511, 1.442695
  %v1513 = vpow.pop %v1512
  %v1514 = vadd.f32 %v1513, 1.0
  %v1515 = vrcp.pop %v1514
  %v1516 = vmul.f32 1.0, %v1515
  %s1517 = scalar_lea.vmem %s0, 42
  %v1518 = vld [vmem:[%s1517] sm:$0x3]
  %v1519 = vmul.f32 %v1507, %v1496
  %v1520 = vadd.f32 %v1518, %v1519
  %v1521 = vtanh.pop %v1520
  %v1522 = vsub.f32 1.0, %v1516
  %v1523 = vmul.f32 %v1522, %v1521
  %v1524 = vmul.f32 %v1516, %v1285
  %v1525 = vadd.f32 %v1523, %v1524
  %1526 = vst.msk [vmem:[#allocation2] sm:$0x3] %vm306, %v1525
  %s1527 = scalar_lea.vmem %s3, 10
  %1528 = vst.msk [vmem:[%s1527] sm:$0x3] %vm306, %v1525
  %v1529 = vld [vmem:[#allocation2] sm:$0x3]
  %v1531 = vsel %vm66, %v1529, 0
  %1533 = vmatprep.subr.mxu0 0.0
  %1534 = vmatpush1.msra.mxu0 0.0
  %1535 = vmatprep.subr.mxu0 0.0
  %1536 = vmatpush1.msra.mxu0 0.0
  %1537 = vmatprep.subr.mxu0 0.0
  %1538 = vmatpush1.msra.mxu0 0.0
  %1539 = vmatprep.subr.mxu0 0.0
  %1540 = vmatpush1.msra.mxu0 0.0
  %1541 = vmatprep.subr.mxu0 0.0
  %1542 = vmatpush1.msra.mxu0 %v31
  %1543 = vmatprep.subr.mxu0 0.0
  %1544 = vmatpush1.msra.mxu0 %v30
  %1545 = vmatprep.subr.mxu0 0.0
  %1546 = vmatpush1.msra.mxu0 %v29
  %1547 = vmatprep.subr.mxu0 0.0
  %1548 = vmatpush1.msra.mxu0 %v28
  %1549 = vmatprep.subr.mxu0 0.0
  %1550 = vmatpush1.msra.mxu0 %v27
  %1551 = vmatprep.subr.mxu0 0.0
  %1552 = vmatpush1.msra.mxu0 %v26
  %1553 = vmatprep.subr.mxu0 0.0
  %1554 = vmatpush1.msra.mxu0 %v25
  %1555 = vmatprep.subr.mxu0 0.0
  %1556 = vmatpush1.msra.mxu0 %v24
  %1557 = vmatprep.subr.mxu0 0.0
  %1558 = vmatpush1.msra.mxu0 %v23
  %1559 = vmatprep.subr.mxu0 0.0
  %1560 = vmatpush1.msra.mxu0 %v22
  %1561 = vmatprep.subr.mxu0 0.0
  %1562 = vmatpush1.msra.mxu0 %v21
  %1563 = vmatprep.subr.mxu0 0.0
  %1564 = vmatpush1.msra.mxu0 %v20
  %1565 = vmatprep.subr.mxu0 0.0
  %1566 = vmatpush2.msra.mxu0 0.0
  %1567 = vmatprep.subr.mxu0 0.0
  %1568 = vmatpush2.msra.mxu0 0.0
  %1569 = vmatprep.subr.mxu0 0.0
  %1570 = vmatpush2.msra.mxu0 0.0
  %1571 = vmatprep.subr.mxu0 0.0
  %1572 = vmatpush2.msra.mxu0 0.0
  %1573 = vmatprep.subr.mxu0 0.0
  %1574 = vmatpush2.msra.mxu0 0.0
  %1575 = vmatprep.subr.mxu0 0.0
  %1576 = vmatpush2.msra.mxu0 0.0
  %1577 = vmatprep.subr.mxu0 0.0
  %1578 = vmatpush2.msra.mxu0 0.0
  %1579 = vmatprep.subr.mxu0 0.0
  %1580 = vmatpush2.msra.mxu0 0.0
  %1581 = vmatprep.subr.mxu0 0.0
  %1582 = vmatpush2.msra.mxu0 0.0
  %1583 = vmatprep.subr.mxu0 0.0
  %1584 = vmatpush2.msra.mxu0 0.0
  %1585 = vmatprep.subr.mxu0 0.0
  %1586 = vmatpush2.msra.mxu0 0.0
  %1587 = vmatprep.subr.mxu0 0.0
  %1588 = vmatpush2.msra.mxu0 0.0
  %1589 = vmatprep.subr.mxu0 0.0
  %1590 = vmatpush2.msra.mxu0 0.0
  %1591 = vmatprep.subr.mxu0 0.0
  %1592 = vmatpush2.msra.mxu0 0.0
  %1593 = vmatprep.subr.mxu0 0.0
  %1594 = vmatpush2.msra.mxu0 0.0
  %1595 = vmatprep.subr.mxu0 0.0
  %1596 = vmatpush2.msra.mxu0 0.0
  %1597 = vmatprep.mubr.f32.mxu0 0.0
  %1598 = vmatmul.mubr.f32.gmra.mxu0 %v1531
  %v1599 = vpop.f32.mrf.mxu0
  %v1600 = vadd.f32 0.0, %v1599
  %v1601 = vpop.f32.mrf.mxu0
  %1602 = vdwg.mxu0
  %1603 = vmatprep.subr.mxu0 0.0
  %1604 = vmatpush1.msra.mxu0 0.0
  %1605 = vmatprep.subr.mxu0 0.0
  %1606 = vmatpush1.msra.mxu0 0.0
  %1607 = vmatprep.subr.mxu0 0.0
  %1608 = vmatpush1.msra.mxu0 0.0
  %1609 = vmatprep.subr.mxu0 0.0
  %1610 = vmatpush1.msra.mxu0 0.0
  %1611 = vmatprep.subr.mxu0 0.0
  %1612 = vmatpush1.msra.mxu0 %v44
  %1613 = vmatprep.subr.mxu0 0.0
  %1614 = vmatpush1.msra.mxu0 %v43
  %1615 = vmatprep.subr.mxu0 0.0
  %1616 = vmatpush1.msra.mxu0 %v42
  %1617 = vmatprep.subr.mxu0 0.0
  %1618 = vmatpush1.msra.mxu0 %v41
  %1619 = vmatprep.subr.mxu0 0.0
  %1620 = vmatpush1.msra.mxu0 %v40
  %1621 = vmatprep.subr.mxu0 0.0
  %1622 = vmatpush1.msra.mxu0 %v39
  %1623 = vmatprep.subr.mxu0 0.0
  %1624 = vmatpush1.msra.mxu0 %v38
  %1625 = vmatprep.subr.mxu0 0.0
  %1626 = vmatpush1.msra.mxu0 %v37
  %1627 = vmatprep.subr.mxu0 0.0
  %1628 = vmatpush1.msra.mxu0 %v36
  %1629 = vmatprep.subr.mxu0 0.0
  %1630 = vmatpush1.msra.mxu0 %v35
  %1631 = vmatprep.subr.mxu0 0.0
  %1632 = vmatpush1.msra.mxu0 %v34
  %1633 = vmatprep.subr.mxu0 0.0
  %1634 = vmatpush1.msra.mxu0 %v33
  %1635 = vmatprep.subr.mxu0 0.0
  %1636 = vmatpush2.msra.mxu0 0.0
  %1637 = vmatprep.subr.mxu0 0.0
  %1638 = vmatpush2.msra.mxu0 0.0
  %1639 = vmatprep.subr.mxu0 0.0
  %1640 = vmatpush2.msra.mxu0 0.0
  %1641 = vmatprep.subr.mxu0 0.0
  %1642 = vmatpush2.msra.mxu0 0.0
  %1643 = vmatprep.subr.mxu0 0.0
  %1644 = vmatpush2.msra.mxu0 0.0
  %1645 = vmatprep.subr.mxu0 0.0
  %1646 = vmatpush2.msra.mxu0 0.0
  %1647 = vmatprep.subr.mxu0 0.0
  %1648 = vmatpush2.msra.mxu0 0.0
  %1649 = vmatprep.subr.mxu0 0.0
  %1650 = vmatpush2.msra.mxu0 0.0
  %1651 = vmatprep.subr.mxu0 0.0
  %1652 = vmatpush2.msra.mxu0 0.0
  %1653 = vmatprep.subr.mxu0 0.0
  %1654 = vmatpush2.msra.mxu0 0.0
  %1655 = vmatprep.subr.mxu0 0.0
  %1656 = vmatpush2.msra.mxu0 0.0
  %1657 = vmatprep.subr.mxu0 0.0
  %1658 = vmatpush2.msra.mxu0 0.0
  %1659 = vmatprep.subr.mxu0 0.0
  %1660 = vmatpush2.msra.mxu0 0.0
  %1661 = vmatprep.subr.mxu0 0.0
  %1662 = vmatpush2.msra.mxu0 0.0
  %1663 = vmatprep.subr.mxu0 0.0
  %1664 = vmatpush2.msra.mxu0 0.0
  %1665 = vmatprep.subr.mxu0 0.0
  %1666 = vmatpush2.msra.mxu0 0.0
  %1667 = vmatprep.mubr.f32.mxu0 0.0
  %1668 = vmatmul.mubr.f32.gmra.mxu0 %v1531
  %v1669 = vpop.f32.mrf.mxu0
  %v1670 = vadd.f32 0.0, %v1669
  %v1671 = vpop.f32.mrf.mxu0
  %1672 = vdwg.mxu0
  %1673 = vmatprep.subr.mxu0 0.0
  %1674 = vmatpush1.msra.mxu0 0.0
  %1675 = vmatprep.subr.mxu0 0.0
  %1676 = vmatpush1.msra.mxu0 0.0
  %1677 = vmatprep.subr.mxu0 0.0
  %1678 = vmatpush1.msra.mxu0 0.0
  %1679 = vmatprep.subr.mxu0 0.0
  %1680 = vmatpush1.msra.mxu0 0.0
  %1681 = vmatprep.subr.mxu0 0.0
  %1682 = vmatpush1.msra.mxu0 %v57
  %1683 = vmatprep.subr.mxu0 0.0
  %1684 = vmatpush1.msra.mxu0 %v56
  %1685 = vmatprep.subr.mxu0 0.0
  %1686 = vmatpush1.msra.mxu0 %v55
  %1687 = vmatprep.subr.mxu0 0.0
  %1688 = vmatpush1.msra.mxu0 %v54
  %1689 = vmatprep.subr.mxu0 0.0
  %1690 = vmatpush1.msra.mxu0 %v53
  %1691 = vmatprep.subr.mxu0 0.0
  %1692 = vmatpush1.msra.mxu0 %v52
  %1693 = vmatprep.subr.mxu0 0.0
  %1694 = vmatpush1.msra.mxu0 %v51
  %1695 = vmatprep.subr.mxu0 0.0
  %1696 = vmatpush1.msra.mxu0 %v50
  %1697 = vmatprep.subr.mxu0 0.0
  %1698 = vmatpush1.msra.mxu0 %v49
  %1699 = vmatprep.subr.mxu0 0.0
  %1700 = vmatpush1.msra.mxu0 %v48
  %1701 = vmatprep.subr.mxu0 0.0
  %1702 = vmatpush1.msra.mxu0 %v47
  %1703 = vmatprep.subr.mxu0 0.0
  %1704 = vmatpush1.msra.mxu0 %v46
  %1705 = vmatprep.subr.mxu0 0.0
  %1706 = vmatpush2.msra.mxu0 0.0
  %1707 = vmatprep.subr.mxu0 0.0
  %1708 = vmatpush2.msra.mxu0 0.0
  %1709 = vmatprep.subr.mxu0 0.0
  %1710 = vmatpush2.msra.mxu0 0.0
  %1711 = vmatprep.subr.mxu0 0.0
  %1712 = vmatpush2.msra.mxu0 0.0
  %1713 = vmatprep.subr.mxu0 0.0
  %1714 = vmatpush2.msra.mxu0 0.0
  %1715 = vmatprep.subr.mxu0 0.0
  %1716 = vmatpush2.msra.mxu0 0.0
  %1717 = vmatprep.subr.mxu0 0.0
  %1718 = vmatpush2.msra.mxu0 0.0
  %1719 = vmatprep.subr.mxu0 0.0
  %1720 = vmatpush2.msra.mxu0 0.0
  %1721 = vmatprep.subr.mxu0 0.0
  %1722 = vmatpush2.msra.mxu0 0.0
  %1723 = vmatprep.subr.mxu0 0.0
  %1724 = vmatpush2.msra.mxu0 0.0
  %1725 = vmatprep.subr.mxu0 0.0
  %1726 = vmatpush2.msra.mxu0 0.0
  %1727 = vmatprep.subr.mxu0 0.0
  %1728 = vmatpush2.msra.mxu0 0.0
  %1729 = vmatprep.subr.mxu0 0.0
  %1730 = vmatpush2.msra.mxu0 0.0
  %1731 = vmatprep.subr.mxu0 0.0
  %1732 = vmatpush2.msra.mxu0 0.0
  %1733 = vmatprep.subr.mxu0 0.0
  %1734 = vmatpush2.msra.mxu0 0.0
  %1735 = vmatprep.subr.mxu0 0.0
  %1736 = vmatpush2.msra.mxu0 0.0
  %1737 = vmatprep.mubr.f32.mxu0 0.0
  %1738 = vmatmul.mubr.f32.gmra.mxu0 %v1531
  %v1739 = vpop.f32.mrf.mxu0
  %v1740 = vadd.f32 %v63, %v1739
  %v1741 = vpop.f32.mrf.mxu0
  %1742 = vdwg.mxu0
  %s1743 = scalar_lea.vmem %s0, 12
  %v1744 = vld [vmem:[%s1743] sm:$0x3]
  %v1745 = vadd.f32 %v1744, %v1600
  %v1746 = vxor.u32 %v1745, 2147483648
  %v1747 = vmul.f32 %v1746, 1.442695
  %v1748 = vpow.pop %v1747
  %v1749 = vadd.f32 %v1748, 1.0
  %v1750 = vrcp.pop %v1749
  %v1751 = vmul.f32 1.0, %v1750
  %s1752 = scalar_lea.vmem %s0, 28
  %v1753 = vld [vmem:[%s1752] sm:$0x3]
  %v1754 = vadd.f32 %v1753, %v1670
  %v1755 = vxor.u32 %v1754, 2147483648
  %v1756 = vmul.f32 %v1755, 1.442695
  %v1757 = vpow.pop %v1756
  %v1758 = vadd.f32 %v1757, 1.0
  %v1759 = vrcp.pop %v1758
  %v1760 = vmul.f32 1.0, %v1759
  %s1761 = scalar_lea.vmem %s0, 44
  %v1762 = vld [vmem:[%s1761] sm:$0x3]
  %v1763 = vmul.f32 %v1751, %v1740
  %v1764 = vadd.f32 %v1762, %v1763
  %v1765 = vtanh.pop %v1764
  %v1766 = vsub.f32 1.0, %v1760
  %v1767 = vmul.f32 %v1766, %v1765
  %v1768 = vmul.f32 %v1760, %v1529
  %v1769 = vadd.f32 %v1767, %v1768
  %1770 = vst.msk [vmem:[#allocation2] sm:$0x3] %vm306, %v1769
  %s1771 = scalar_lea.vmem %s3, 12
  %1772 = vst.msk [vmem:[%s1771] sm:$0x3] %vm306, %v1769
  %v1773 = vld [vmem:[#allocation2] sm:$0x3]
  %v1775 = vsel %vm66, %v1773, 0
  %1777 = vmatprep.subr.mxu0 0.0
  %1778 = vmatpush1.msra.mxu0 0.0
  %1779 = vmatprep.subr.mxu0 0.0
  %1780 = vmatpush1.msra.mxu0 0.0
  %1781 = vmatprep.subr.mxu0 0.0
  %1782 = vmatpush1.msra.mxu0 0.0
  %1783 = vmatprep.subr.mxu0 0.0
  %1784 = vmatpush1.msra.mxu0 0.0
  %1785 = vmatprep.subr.mxu0 0.0
  %1786 = vmatpush1.msra.mxu0 %v31
  %1787 = vmatprep.subr.mxu0 0.0
  %1788 = vmatpush1.msra.mxu0 %v30
  %1789 = vmatprep.subr.mxu0 0.0
  %1790 = vmatpush1.msra.mxu0 %v29
  %1791 = vmatprep.subr.mxu0 0.0
  %1792 = vmatpush1.msra.mxu0 %v28
  %1793 = vmatprep.subr.mxu0 0.0
  %1794 = vmatpush1.msra.mxu0 %v27
  %1795 = vmatprep.subr.mxu0 0.0
  %1796 = vmatpush1.msra.mxu0 %v26
  %1797 = vmatprep.subr.mxu0 0.0
  %1798 = vmatpush1.msra.mxu0 %v25
  %1799 = vmatprep.subr.mxu0 0.0
  %1800 = vmatpush1.msra.mxu0 %v24
  %1801 = vmatprep.subr.mxu0 0.0
  %1802 = vmatpush1.msra.mxu0 %v23
  %1803 = vmatprep.subr.mxu0 0.0
  %1804 = vmatpush1.msra.mxu0 %v22
  %1805 = vmatprep.subr.mxu0 0.0
  %1806 = vmatpush1.msra.mxu0 %v21
  %1807 = vmatprep.subr.mxu0 0.0
  %1808 = vmatpush1.msra.mxu0 %v20
  %1809 = vmatprep.subr.mxu0 0.0
  %1810 = vmatpush2.msra.mxu0 0.0
  %1811 = vmatprep.subr.mxu0 0.0
  %1812 = vmatpush2.msra.mxu0 0.0
  %1813 = vmatprep.subr.mxu0 0.0
  %1814 = vmatpush2.msra.mxu0 0.0
  %1815 = vmatprep.subr.mxu0 0.0
  %1816 = vmatpush2.msra.mxu0 0.0
  %1817 = vmatprep.subr.mxu0 0.0
  %1818 = vmatpush2.msra.mxu0 0.0
  %1819 = vmatprep.subr.mxu0 0.0
  %1820 = vmatpush2.msra.mxu0 0.0
  %1821 = vmatprep.subr.mxu0 0.0
  %1822 = vmatpush2.msra.mxu0 0.0
  %1823 = vmatprep.subr.mxu0 0.0
  %1824 = vmatpush2.msra.mxu0 0.0
  %1825 = vmatprep.subr.mxu0 0.0
  %1826 = vmatpush2.msra.mxu0 0.0
  %1827 = vmatprep.subr.mxu0 0.0
  %1828 = vmatpush2.msra.mxu0 0.0
  %1829 = vmatprep.subr.mxu0 0.0
  %1830 = vmatpush2.msra.mxu0 0.0
  %1831 = vmatprep.subr.mxu0 0.0
  %1832 = vmatpush2.msra.mxu0 0.0
  %1833 = vmatprep.subr.mxu0 0.0
  %1834 = vmatpush2.msra.mxu0 0.0
  %1835 = vmatprep.subr.mxu0 0.0
  %1836 = vmatpush2.msra.mxu0 0.0
  %1837 = vmatprep.subr.mxu0 0.0
  %1838 = vmatpush2.msra.mxu0 0.0
  %1839 = vmatprep.subr.mxu0 0.0
  %1840 = vmatpush2.msra.mxu0 0.0
  %1841 = vmatprep.mubr.f32.mxu0 0.0
  %1842 = vmatmul.mubr.f32.gmra.mxu0 %v1775
  %v1843 = vpop.f32.mrf.mxu0
  %v1844 = vadd.f32 0.0, %v1843
  %v1845 = vpop.f32.mrf.mxu0
  %1846 = vdwg.mxu0
  %1847 = vmatprep.subr.mxu0 0.0
  %1848 = vmatpush1.msra.mxu0 0.0
  %1849 = vmatprep.subr.mxu0 0.0
  %1850 = vmatpush1.msra.mxu0 0.0
  %1851 = vmatprep.subr.mxu0 0.0
  %1852 = vmatpush1.msra.mxu0 0.0
  %1853 = vmatprep.subr.mxu0 0.0
  %1854 = vmatpush1.msra.mxu0 0.0
  %1855 = vmatprep.subr.mxu0 0.0
  %1856 = vmatpush1.msra.mxu0 %v44
  %1857 = vmatprep.subr.mxu0 0.0
  %1858 = vmatpush1.msra.mxu0 %v43
  %1859 = vmatprep.subr.mxu0 0.0
  %1860 = vmatpush1.msra.mxu0 %v42
  %1861 = vmatprep.subr.mxu0 0.0
  %1862 = vmatpush1.msra.mxu0 %v41
  %1863 = vmatprep.subr.mxu0 0.0
  %1864 = vmatpush1.msra.mxu0 %v40
  %1865 = vmatprep.subr.mxu0 0.0
  %1866 = vmatpush1.msra.mxu0 %v39
  %1867 = vmatprep.subr.mxu0 0.0
  %1868 = vmatpush1.msra.mxu0 %v38
  %1869 = vmatprep.subr.mxu0 0.0
  %1870 = vmatpush1.msra.mxu0 %v37
  %1871 = vmatprep.subr.mxu0 0.0
  %1872 = vmatpush1.msra.mxu0 %v36
  %1873 = vmatprep.subr.mxu0 0.0
  %1874 = vmatpush1.msra.mxu0 %v35
  %1875 = vmatprep.subr.mxu0 0.0
  %1876 = vmatpush1.msra.mxu0 %v34
  %1877 = vmatprep.subr.mxu0 0.0
  %1878 = vmatpush1.msra.mxu0 %v33
  %1879 = vmatprep.subr.mxu0 0.0
  %1880 = vmatpush2.msra.mxu0 0.0
  %1881 = vmatprep.subr.mxu0 0.0
  %1882 = vmatpush2.msra.mxu0 0.0
  %1883 = vmatprep.subr.mxu0 0.0
  %1884 = vmatpush2.msra.mxu0 0.0
  %1885 = vmatprep.subr.mxu0 0.0
  %1886 = vmatpush2.msra.mxu0 0.0
  %1887 = vmatprep.subr.mxu0 0.0
  %1888 = vmatpush2.msra.mxu0 0.0
  %1889 = vmatprep.subr.mxu0 0.0
  %1890 = vmatpush2.msra.mxu0 0.0
  %1891 = vmatprep.subr.mxu0 0.0
  %1892 = vmatpush2.msra.mxu0 0.0
  %1893 = vmatprep.subr.mxu0 0.0
  %1894 = vmatpush2.msra.mxu0 0.0
  %1895 = vmatprep.subr.mxu0 0.0
  %1896 = vmatpush2.msra.mxu0 0.0
  %1897 = vmatprep.subr.mxu0 0.0
  %1898 = vmatpush2.msra.mxu0 0.0
  %1899 = vmatprep.subr.mxu0 0.0
  %1900 = vmatpush2.msra.mxu0 0.0
  %1901 = vmatprep.subr.mxu0 0.0
  %1902 = vmatpush2.msra.mxu0 0.0
  %1903 = vmatprep.subr.mxu0 0.0
  %1904 = vmatpush2.msra.mxu0 0.0
  %1905 = vmatprep.subr.mxu0 0.0
  %1906 = vmatpush2.msra.mxu0 0.0
  %1907 = vmatprep.subr.mxu0 0.0
  %1908 = vmatpush2.msra.mxu0 0.0
  %1909 = vmatprep.subr.mxu0 0.0
  %1910 = vmatpush2.msra.mxu0 0.0
  %1911 = vmatprep.mubr.f32.mxu0 0.0
  %1912 = vmatmul.mubr.f32.gmra.mxu0 %v1775
  %v1913 = vpop.f32.mrf.mxu0
  %v1914 = vadd.f32 0.0, %v1913
  %v1915 = vpop.f32.mrf.mxu0
  %1916 = vdwg.mxu0
  %1917 = vmatprep.subr.mxu0 0.0
  %1918 = vmatpush1.msra.mxu0 0.0
  %1919 = vmatprep.subr.mxu0 0.0
  %1920 = vmatpush1.msra.mxu0 0.0
  %1921 = vmatprep.subr.mxu0 0.0
  %1922 = vmatpush1.msra.mxu0 0.0
  %1923 = vmatprep.subr.mxu0 0.0
  %1924 = vmatpush1.msra.mxu0 0.0
  %1925 = vmatprep.subr.mxu0 0.0
  %1926 = vmatpush1.msra.mxu0 %v57
  %1927 = vmatprep.subr.mxu0 0.0
  %1928 = vmatpush1.msra.mxu0 %v56
  %1929 = vmatprep.subr.mxu0 0.0
  %1930 = vmatpush1.msra.mxu0 %v55
  %1931 = vmatprep.subr.mxu0 0.0
  %1932 = vmatpush1.msra.mxu0 %v54
  %1933 = vmatprep.subr.mxu0 0.0
  %1934 = vmatpush1.msra.mxu0 %v53
  %1935 = vmatprep.subr.mxu0 0.0
  %1936 = vmatpush1.msra.mxu0 %v52
  %1937 = vmatprep.subr.mxu0 0.0
  %1938 = vmatpush1.msra.mxu0 %v51
  %1939 = vmatprep.subr.mxu0 0.0
  %1940 = vmatpush1.msra.mxu0 %v50
  %1941 = vmatprep.subr.mxu0 0.0
  %1942 = vmatpush1.msra.mxu0 %v49
  %1943 = vmatprep.subr.mxu0 0.0
  %1944 = vmatpush1.msra.mxu0 %v48
  %1945 = vmatprep.subr.mxu0 0.0
  %1946 = vmatpush1.msra.mxu0 %v47
  %1947 = vmatprep.subr.mxu0 0.0
  %1948 = vmatpush1.msra.mxu0 %v46
  %1949 = vmatprep.subr.mxu0 0.0
  %1950 = vmatpush2.msra.mxu0 0.0
  %1951 = vmatprep.subr.mxu0 0.0
  %1952 = vmatpush2.msra.mxu0 0.0
  %1953 = vmatprep.subr.mxu0 0.0
  %1954 = vmatpush2.msra.mxu0 0.0
  %1955 = vmatprep.subr.mxu0 0.0
  %1956 = vmatpush2.msra.mxu0 0.0
  %1957 = vmatprep.subr.mxu0 0.0
  %1958 = vmatpush2.msra.mxu0 0.0
  %1959 = vmatprep.subr.mxu0 0.0
  %1960 = vmatpush2.msra.mxu0 0.0
  %1961 = vmatprep.subr.mxu0 0.0
  %1962 = vmatpush2.msra.mxu0 0.0
  %1963 = vmatprep.subr.mxu0 0.0
  %1964 = vmatpush2.msra.mxu0 0.0
  %1965 = vmatprep.subr.mxu0 0.0
  %1966 = vmatpush2.msra.mxu0 0.0
  %1967 = vmatprep.subr.mxu0 0.0
  %1968 = vmatpush2.msra.mxu0 0.0
  %1969 = vmatprep.subr.mxu0 0.0
  %1970 = vmatpush2.msra.mxu0 0.0
  %1971 = vmatprep.subr.mxu0 0.0
  %1972 = vmatpush2.msra.mxu0 0.0
  %1973 = vmatprep.subr.mxu0 0.0
  %1974 = vmatpush2.msra.mxu0 0.0
  %1975 = vmatprep.subr.mxu0 0.0
  %1976 = vmatpush2.msra.mxu0 0.0
  %1977 = vmatprep.subr.mxu0 0.0
  %1978 = vmatpush2.msra.mxu0 0.0
  %1979 = vmatprep.subr.mxu0 0.0
  %1980 = vmatpush2.msra.mxu0 0.0
  %1981 = vmatprep.mubr.f32.mxu0 0.0
  %1982 = vmatmul.mubr.f32.gmra.mxu0 %v1775
  %v1983 = vpop.f32.mrf.mxu0
  %v1984 = vadd.f32 %v63, %v1983
  %v1985 = vpop.f32.mrf.mxu0
  %1986 = vdwg.mxu0
  %s1987 = scalar_lea.vmem %s0, 14
  %v1988 = vld [vmem:[%s1987] sm:$0x3]
  %v1989 = vadd.f32 %v1988, %v1844
  %v1990 = vxor.u32 %v1989, 2147483648
  %v1991 = vmul.f32 %v1990, 1.442695
  %v1992 = vpow.pop %v1991
  %v1993 = vadd.f32 %v1992, 1.0
  %v1994 = vrcp.pop %v1993
  %v1995 = vmul.f32 1.0, %v1994
  %s1996 = scalar_lea.vmem %s0, 30
  %v1997 = vld [vmem:[%s1996] sm:$0x3]
  %v1998 = vadd.f32 %v1997, %v1914
  %v1999 = vxor.u32 %v1998, 2147483648
  %v2000 = vmul.f32 %v1999, 1.442695
  %v2001 = vpow.pop %v2000
  %v2002 = vadd.f32 %v2001, 1.0
  %v2003 = vrcp.pop %v2002
  %v2004 = vmul.f32 1.0, %v2003
  %s2005 = scalar_lea.vmem %s0, 46
  %v2006 = vld [vmem:[%s2005] sm:$0x3]
  %v2007 = vmul.f32 %v1995, %v1984
  %v2008 = vadd.f32 %v2006, %v2007
  %v2009 = vtanh.pop %v2008
  %v2010 = vsub.f32 1.0, %v2004
  %v2011 = vmul.f32 %v2010, %v2009
  %v2012 = vmul.f32 %v2004, %v1773
  %v2013 = vadd.f32 %v2011, %v2012
  %2014 = vst.msk [vmem:[#allocation2] sm:$0x3] %vm306, %v2013
  %s2015 = scalar_lea.vmem %s3, 14
  %2016 = vst.msk [vmem:[%s2015] sm:$0x3] %vm306, %v2013
  // Predicated region
  $region18: #{krnn_encoder_forward.2} parent=0 // pred_check
    _
  $region19: #{krnn_encoder_forward.2} parent=0 // pred_check_branch
    %2018 = sbr.rel (0) target = $region21
  $region20: #{krnn_encoder_forward.2} parent=0 // pred_region
    _
  $region21: #{krnn_encoder_forward.2} parent=0 // pred_fallthru
    _
  // Predicated region
  $region22: #{krnn_encoder_forward.2} parent=0 // pred_check
    _
  $region23: #{krnn_encoder_forward.2} parent=0 // pred_check_branch
    %2020 = sbr.rel (0) target = $region25
  $region24: #{krnn_encoder_forward.2} parent=0 // pred_region
    _
  $region25: #{krnn_encoder_forward.2} parent=0 // pred_fallthru
    _

</llo_original>
